<compile_context>
chip_gen: v7x
topology: tpu7x:2x2x1
jax: 0.10.0
libtpu: 0.0.40
codegen_flags: <defaults>
</compile_context>

<pallas_src>
import jax
import jax.numpy as jnp
from jax.experimental import pallas as pl
from jax.experimental.pallas import tpu as pltpu

KERNEL = 7   # nn.Conv2d(2, 1, (7, 7), padding=3, bias=False)
PAD = 3


def _build_shift_masks(H, W):
    """(2*KERNEL, H*W) float32 0/1 masks.

    Row dy   (0..6):  1 where source row  y + dy - PAD lies inside [0, H).
    Row 7+dx (0..6):  1 where source col  x + dx - PAD lies inside [0, W).
    Rolling the flattened (H*W) map and multiplying by these masks reproduces a
    zero-padded 7x7 window without any in-kernel padding / unaligned slices.
    """
    idx = jnp.arange(H * W, dtype=jnp.int32)
    yy = idx // W
    xx = idx % W
    rows = [((yy + (dy - PAD) >= 0) & (yy + (dy - PAD) < H)) for dy in range(KERNEL)]
    cols = [((xx + (dx - PAD) >= 0) & (xx + (dx - PAD) < W)) for dx in range(KERNEL)]
    return jnp.stack(rows + cols).astype(jnp.float32)


def _choose_channel_tile(C, hw, itemsize):
    """Largest channel chunk whose double-buffered block stays in budget.
    Must be a multiple of 8 (sublane tiling) unless it covers all of C."""
    per_buffer_budget = 8 * 1024 * 1024
    if C * hw * itemsize <= per_buffer_budget:
        return C
    tc = (per_buffer_budget // (hw * itemsize)) // 8 * 8
    tc = max(8, int(tc))
    return min(tc, max(8, (C // 8) * 8))


def _choose_batch_tile(N, C, hw, itemsize, num_c_chunks):
    """Pack several images per grid step when one image is tiny, but keep
    >= 2 parallel grid steps when possible (v7x has 2 TensorCores)."""
    if num_c_chunks > 1 or N <= 1:
        return 1
    per_n = C * hw * itemsize
    budget = 4 * 1024 * 1024
    best = 1
    for tn in range(1, N + 1):
        if N % tn != 0:
            continue
        if tn * per_n > budget:
            break
        if N // tn >= 2 or N == 1:
            best = tn
    return best


def _make_kernel(*, C, TC, H, W, needs_cmask):
    HW = H * W
    KK = KERNEL * KERNEL
    inv_c = 1.0 / C

    def kernel(w_ref, mask_ref, x_ref, o_ref, sum_ref, max_ref):
        k = pl.program_id(1)

        # ---- init accumulators on the first channel chunk -------------------
        @pl.when(k == 0)
        def _init():
            sum_ref[...] = jnp.zeros_like(sum_ref)
            max_ref[...] = jnp.full_like(max_ref, -jnp.inf)

        # ---- streamed channel reduction (the HBM-bound part) ----------------
        xc = x_ref[...]                                    # (TN, TC, HW), native dtype
        if needs_cmask:
            # Last chunk may extend past C: mask the padded channel rows.
            c_idx = k * TC + jax.lax.broadcasted_iota(jnp.int32, (1, TC, 1), 1)
            valid = c_idx < C
            x_for_sum = jnp.where(valid, xc, jnp.zeros((), xc.dtype))
            x_for_max = jnp.where(valid, xc, jnp.asarray(-jnp.inf, xc.dtype))
        else:
            x_for_sum = xc
            x_for_max = xc

        sum_ref[...] += jnp.sum(x_for_sum.astype(jnp.float32), axis=1, keepdims=True)
        max_ref[...] = jnp.maximum(
            max_ref[...],
            jnp.max(x_for_max, axis=1, keepdims=True).astype(jnp.float32))

        # ---- epilogue: 7x7 conv (2 -> 1 ch) + sigmoid, last chunk only ------
        @pl.when(k == pl.num_programs(1) - 1)
        def _epilogue():
            avg = sum_ref[...] * jnp.float32(inv_c)        # (TN, 1, HW), true-C mean
            mx = max_ref[...]                              # (TN, 1, HW)

            # Stage 1: hoist the 7 row (dy) shifts out of the tap loop.
            avg_rows, max_rows = [], []
            for dy in range(KERNEL):
                shift = (-(dy - PAD) * W) % HW
                a = avg if shift == 0 else pltpu.roll(avg, shift=shift, axis=2)
                m = mx if shift == 0 else pltpu.roll(mx, shift=shift, axis=2)
                if dy != PAD:
                    rmask = mask_ref[dy:dy + 1, :]         # (1, HW) 0/1
                    a = a * rmask
                    m = m * rmask
                avg_rows.append(a)
                max_rows.append(m)

            # Stage 2: accumulate taps; only 7 more lane shifts (one per dx).
            acc = None
            for dx in range(KERNEL):
                q = None
                for dy in range(KERNEL):
                    w_a = w_ref[dy * KERNEL + dx]          # weight on the avg map
                    w_m = w_ref[KK + dy * KERNEL + dx]     # weight on the max map
                    t = w_a * avg_rows[dy] + w_m * max_rows[dy]
                    q = t if q is None else q + t
                shift = (-(dx - PAD)) % HW
                if shift != 0:
                    q = pltpu.roll(q, shift=shift, axis=2)
                if dx != PAD:
                    q = q * mask_ref[KERNEL + dx:KERNEL + dx + 1, :]
                acc = q if acc is None else acc + q

            o_ref[...] = jax.nn.sigmoid(acc).astype(o_ref.dtype)

    return kernel


def spatial_attention(x, weight, *, channel_tile=None, batch_tile=None):
    """x: (N, C, H, W) float; weight: (1, 2, 7, 7) conv weight (no bias)."""
    N, C, H, W = x.shape
    assert weight.shape == (1, 2, KERNEL, KERNEL)
    assert jnp.issubdtype(x.dtype, jnp.floating)
    HW = H * W
    itemsize = jnp.dtype(x.dtype).itemsize

    TC = channel_tile if channel_tile is not None else _choose_channel_tile(C, HW, itemsize)
    assert TC == C or (TC % 8 == 0 and TC <= C), "channel tile must be C or a multiple of 8"
    num_k = int(pl.cdiv(C, TC))
    TN = batch_tile if batch_tile is not None else _choose_batch_tile(N, C, HW, itemsize, num_k)
    assert N % TN == 0, "batch tile must divide N"
    needs_cmask = (C % TC) != 0

    # Lane-dense layout: spatial dims flattened onto the lane axis.
    x_flat = x.reshape(N, C, HW)
    w_flat = weight.reshape(-1).astype(jnp.float32)          # (2*7*7,) -> SMEM
    masks = _build_shift_masks(H, W)                         # (14, HW) f32 0/1

    kernel = _make_kernel(C=C, TC=TC, H=H, W=W, needs_cmask=needs_cmask)

    cost = pl.CostEstimate(
        flops=int(N * C * HW * 2 + N * HW * (4 * KERNEL * KERNEL + 2 * KERNEL + 4)),
        transcendentals=int(N * HW),
        bytes_accessed=int(N * C * HW * itemsize + N * HW * itemsize
                           + masks.size * 4 + w_flat.size * 4))

    out_flat = pl.pallas_call(
        kernel,
        out_shape=jax.ShapeDtypeStruct((N, 1, HW), x.dtype),
        grid=(N // TN, num_k),
        in_specs=[
            pl.BlockSpec(memory_space=pltpu.MemorySpace.SMEM),        # conv weights
            pl.BlockSpec((2 * KERNEL, HW), lambda n, k: (0, 0)),      # boundary masks
            pl.BlockSpec((TN, TC, HW), lambda n, k: (n, k, 0)),       # x chunk
        ],
        out_specs=pl.BlockSpec((TN, 1, HW), lambda n, k: (n, 0, 0)),
        scratch_shapes=[
            pltpu.VMEM((TN, 1, HW), jnp.float32),                     # running sum
            pltpu.VMEM((TN, 1, HW), jnp.float32),                     # running max
        ],
        compiler_params=pltpu.CompilerParams(
            dimension_semantics=("parallel", "arbitrary"),
            vmem_limit_bytes=32 * 1024 * 1024),
        cost_estimate=cost,
    )(w_flat, masks, x_flat)

    return out_flat.reshape(N, 1, H, W)


def _reference(x, weight):
    # Pure-JAX reference for verification (f32).
    avg = jnp.mean(x, axis=1, keepdims=True)
    mx = jnp.max(x, axis=1, keepdims=True)
    cat = jnp.concatenate([avg, mx], axis=1)
    conv = jax.lax.conv_general_dilated(
        cat.astype(jnp.float32), weight.astype(jnp.float32),
        window_strides=(1, 1), padding=((PAD, PAD), (PAD, PAD)),
        dimension_numbers=("NCHW", "OIHW", "NCHW"))
    return jax.nn.sigmoid(conv)


def _check(name, x, weight, atol, **kwargs):
    out = jax.block_until_ready(spatial_attention(x, weight, **kwargs))
    ref = _reference(x.astype(jnp.float32), weight)
    assert out.shape == (x.shape[0], 1, x.shape[2], x.shape[3]), name
    err = float(jnp.max(jnp.abs(out.astype(jnp.float32) - ref)))
    assert err <= atol, f"{name}: max abs err {err}"


if __name__ == "__main__":
    key = jax.random.PRNGKey(0)
    kx1, kx2, kx3, kx4, kw = jax.random.split(key, 5)

    # Deterministic Conv2d(2, 1, 7, bias=False) weight init (kaiming-uniform-like).
    fan_in = 2 * KERNEL * KERNEL
    bound = 1.0 / (fan_in ** 0.5)
    weight = jax.random.uniform(kw, (1, 2, KERNEL, KERNEL),
                                minval=-bound, maxval=bound, dtype=jnp.float32)

    # 1) Spec-sized case (N=2, C=4, 16x16), automatic tiling.
    x1 = jax.random.normal(kx1, (2, 4, 16, 16), dtype=jnp.float32)
    _check("base_f32", x1, weight, atol=1e-5)

    # 2) Channel-tiled path: C=20 with an 8-channel tile -> 3 chunks, masked tail.
    x2 = jax.random.normal(kx2, (1, 20, 16, 16), dtype=jnp.float32)
    _check("channel_tiled", x2, weight, atol=1e-5, channel_tile=8)

    # 3) Batched grid steps (2 images per step).
    x3 = jax.random.normal(kx3, (4, 4, 16, 16), dtype=jnp.float32)
    _check("batch_tiled", x3, weight, atol=1e-5, batch_tile=2)

    # 4) bf16 activations (per-chunk f32 sum, native-dtype running max).
    x4 = jax.random.normal(kx4, (2, 4, 16, 16), dtype=jnp.bfloat16)
    _check("bf16", x4, weight, atol=1e-2)

    print("KERNEL_OK")
</pallas_src>

<mosaic_0001>
module attributes {stable_mosaic.version = 11 : i64} {
  func.func @kernel(%arg0: i32, %arg1: i32, %arg2: memref<98xf32, #tpu.memory_space<smem>>, %arg3: memref<14x256xf32, #tpu.memory_space<vmem>>, %arg4: memref<1x4x256xf32, #tpu.memory_space<vmem>>, %arg5: memref<1x1x256xf32, #tpu.memory_space<vmem>>, %arg6: memref<1x1x256xf32, #tpu.memory_space<vmem>>, %arg7: memref<1x1x256xf32, #tpu.memory_space<vmem>>) attributes {dimension_semantics = [#tpu.dimension_semantics<parallel>, #tpu.dimension_semantics<arbitrary>], iteration_bounds = array<i64: 2, 1>, scalar_prefetch = 0 : i64, scratch_operands = 2 : i64, tpu.core_type = #tpu.core_type<tc>, window_params = [{transform_indices = @transform_0, window_bounds = array<i64: 98>}, {pipeline_mode = #tpu.pipeline_mode<synchronous>, transform_indices = @transform_1, window_bounds = array<i64: 14, 256>}, {transform_indices = @transform_2, window_bounds = array<i64: 1, 4, 256>}, {transform_indices = @transform_3, window_bounds = array<i64: 1, 1, 256>}]} {
    %c0_i32 = arith.constant 0 : i32
    %0 = arith.cmpi eq, %arg1, %c0_i32 : i32
    %1 = arith.extui %0 : i1 to i32
    %c0_i32_0 = arith.constant 0 : i32
    %2 = arith.cmpi ne, %1, %c0_i32_0 : i32
    scf.if %2 {
      %cst_18 = arith.constant 0.000000e+00 : f32
      %17 = vector.broadcast %cst_18 : f32 to vector<1x1x256xf32>
      %c0_19 = arith.constant 0 : index
      %c0_20 = arith.constant 0 : index
      %c0_21 = arith.constant 0 : index
      %18 = vector.load %arg6[%c0_19, %c0_20, %c0_21] : memref<1x1x256xf32, #tpu.memory_space<vmem>>, vector<1x1x256xf32>
      tpu.vector_store %arg6[%c0_19, %c0_20, %c0_21], %17 {strides = array<i32>} : memref<1x1x256xf32, #tpu.memory_space<vmem>>, vector<1x1x256xf32>,
      %cst_22 = arith.constant 0xFF800000 : f32
      %19 = vector.broadcast %cst_22 : f32 to vector<1x1x256xf32>
      %c0_23 = arith.constant 0 : index
      %c0_24 = arith.constant 0 : index
      %c0_25 = arith.constant 0 : index
      %20 = vector.load %arg7[%c0_23, %c0_24, %c0_25] : memref<1x1x256xf32, #tpu.memory_space<vmem>>, vector<1x1x256xf32>
      tpu.vector_store %arg7[%c0_23, %c0_24, %c0_25], %19 {strides = array<i32>} : memref<1x1x256xf32, #tpu.memory_space<vmem>>, vector<1x1x256xf32>,
    } else {
    }
    %c0 = arith.constant 0 : index
    %c0_1 = arith.constant 0 : index
    %c0_2 = arith.constant 0 : index
    %3 = vector.load %arg4[%c0, %c0_1, %c0_2] : memref<1x4x256xf32, #tpu.memory_space<vmem>>, vector<1x4x256xf32>
    %c0_3 = arith.constant 0 : index
    %c0_4 = arith.constant 0 : index
    %c0_5 = arith.constant 0 : index
    %4 = vector.load %arg6[%c0_3, %c0_4, %c0_5] : memref<1x1x256xf32, #tpu.memory_space<vmem>>, vector<1x1x256xf32>
    %cst = arith.constant dense<0.000000e+00> : vector<1x256xf32>
    %5 = vector.multi_reduction <add>, %3, %cst [1] : vector<1x4x256xf32> to vector<1x256xf32>
    %6 = vector.shape_cast %5 : vector<1x256xf32> to vector<1x1x256xf32>
    %7 = arith.addf %4, %6 : vector<1x1x256xf32>
    %c0_6 = arith.constant 0 : index
    %c0_7 = arith.constant 0 : index
    %c0_8 = arith.constant 0 : index
    %8 = vector.load %arg6[%c0_6, %c0_7, %c0_8] : memref<1x1x256xf32, #tpu.memory_space<vmem>>, vector<1x1x256xf32>
    tpu.vector_store %arg6[%c0_6, %c0_7, %c0_8], %7 {strides = array<i32>} : memref<1x1x256xf32, #tpu.memory_space<vmem>>, vector<1x1x256xf32>,
    %c0_9 = arith.constant 0 : index
    %c0_10 = arith.constant 0 : index
    %c0_11 = arith.constant 0 : index
    %9 = vector.load %arg7[%c0_9, %c0_10, %c0_11] : memref<1x1x256xf32, #tpu.memory_space<vmem>>, vector<1x1x256xf32>
    %cst_12 = arith.constant dense<0xFF800000> : vector<1x256xf32>
    %10 = vector.multi_reduction <maximumf>, %3, %cst_12 [1] : vector<1x4x256xf32> to vector<1x256xf32>
    %11 = vector.shape_cast %10 : vector<1x256xf32> to vector<1x1x256xf32>
    %12 = arith.maximumf %9, %11 : vector<1x1x256xf32>
    %c0_13 = arith.constant 0 : index
    %c0_14 = arith.constant 0 : index
    %c0_15 = arith.constant 0 : index
    %13 = vector.load %arg7[%c0_13, %c0_14, %c0_15] : memref<1x1x256xf32, #tpu.memory_space<vmem>>, vector<1x1x256xf32>
    tpu.vector_store %arg7[%c0_13, %c0_14, %c0_15], %12 {strides = array<i32>} : memref<1x1x256xf32, #tpu.memory_space<vmem>>, vector<1x1x256xf32>,
    %c0_i32_16 = arith.constant 0 : i32
    %14 = arith.cmpi eq, %arg1, %c0_i32_16 : i32
    %15 = arith.extui %14 : i1 to i32
    %c0_i32_17 = arith.constant 0 : i32
    %16 = arith.cmpi ne, %15, %c0_i32_17 : i32
    scf.if %16 {
      %c0_18 = arith.constant 0 : index
      %c0_19 = arith.constant 0 : index
      %c0_20 = arith.constant 0 : index
      %17 = vector.load %arg6[%c0_18, %c0_19, %c0_20] : memref<1x1x256xf32, #tpu.memory_space<vmem>>, vector<1x1x256xf32>
      %cst_21 = arith.constant 2.500000e-01 : f32
      %18 = vector.broadcast %cst_21 : f32 to vector<1x1x256xf32>
      %19 = arith.mulf %17, %18 : vector<1x1x256xf32>
      %c0_22 = arith.constant 0 : index
      %c0_23 = arith.constant 0 : index
      %c0_24 = arith.constant 0 : index
      %20 = vector.load %arg7[%c0_22, %c0_23, %c0_24] : memref<1x1x256xf32, #tpu.memory_space<vmem>>, vector<1x1x256xf32>
      %c48_i32 = arith.constant 48 : i32
      %21 = tpu.dynamic_rotate %19 by %c48_i32 dim 2 : vector<1x1x256xf32>, i32 -> vector<1x1x256xf32>
      %c48_i32_25 = arith.constant 48 : i32
      %22 = tpu.dynamic_rotate %20 by %c48_i32_25 dim 2 : vector<1x1x256xf32>, i32 -> vector<1x1x256xf32>
      %c0_26 = arith.constant 0 : index
      %c0_27 = arith.constant 0 : index
      %23 = vector.load %arg3[%c0_26, %c0_27] : memref<14x256xf32, #tpu.memory_space<vmem>>, vector<1x256xf32>
      %24 = vector.shape_cast %23 : vector<1x256xf32> to vector<1x1x256xf32>
      %25 = arith.mulf %21, %24 : vector<1x1x256xf32>
      %26 = vector.shape_cast %23 : vector<1x256xf32> to vector<1x1x256xf32>
      %27 = arith.mulf %22, %26 : vector<1x1x256xf32>
      %c32_i32 = arith.constant 32 : i32
      %28 = tpu.dynamic_rotate %19 by %c32_i32 dim 2 : vector<1x1x256xf32>, i32 -> vector<1x1x256xf32>
      %c32_i32_28 = arith.constant 32 : i32
      %29 = tpu.dynamic_rotate %20 by %c32_i32_28 dim 2 : vector<1x1x256xf32>, i32 -> vector<1x1x256xf32>
      %c1 = arith.constant 1 : index
      %c0_29 = arith.constant 0 : index
      %30 = vector.load %arg3[%c1, %c0_29] : memref<14x256xf32, #tpu.memory_space<vmem>>, vector<1x256xf32>
      %31 = vector.shape_cast %30 : vector<1x256xf32> to vector<1x1x256xf32>
      %32 = arith.mulf %28, %31 : vector<1x1x256xf32>
      %33 = vector.shape_cast %30 : vector<1x256xf32> to vector<1x1x256xf32>
      %34 = arith.mulf %29, %33 : vector<1x1x256xf32>
      %c16_i32 = arith.constant 16 : i32
      %35 = tpu.dynamic_rotate %19 by %c16_i32 dim 2 : vector<1x1x256xf32>, i32 -> vector<1x1x256xf32>
      %c16_i32_30 = arith.constant 16 : i32
      %36 = tpu.dynamic_rotate %20 by %c16_i32_30 dim 2 : vector<1x1x256xf32>, i32 -> vector<1x1x256xf32>
      %c2 = arith.constant 2 : index
      %c0_31 = arith.constant 0 : index
      %37 = vector.load %arg3[%c2, %c0_31] : memref<14x256xf32, #tpu.memory_space<vmem>>, vector<1x256xf32>
      %38 = vector.shape_cast %37 : vector<1x256xf32> to vector<1x1x256xf32>
      %39 = arith.mulf %35, %38 : vector<1x1x256xf32>
      %40 = vector.shape_cast %37 : vector<1x256xf32> to vector<1x1x256xf32>
      %41 = arith.mulf %36, %40 : vector<1x1x256xf32>
      %c240_i32 = arith.constant 240 : i32
      %42 = tpu.dynamic_rotate %19 by %c240_i32 dim 2 : vector<1x1x256xf32>, i32 -> vector<1x1x256xf32>
      %c240_i32_32 = arith.constant 240 : i32
      %43 = tpu.dynamic_rotate %20 by %c240_i32_32 dim 2 : vector<1x1x256xf32>, i32 -> vector<1x1x256xf32>
      %c4 = arith.constant 4 : index
      %c0_33 = arith.constant 0 : index
      %44 = vector.load %arg3[%c4, %c0_33] : memref<14x256xf32, #tpu.memory_space<vmem>>, vector<1x256xf32>
      %45 = vector.shape_cast %44 : vector<1x256xf32> to vector<1x1x256xf32>
      %46 = arith.mulf %42, %45 : vector<1x1x256xf32>
      %47 = vector.shape_cast %44 : vector<1x256xf32> to vector<1x1x256xf32>
      %48 = arith.mulf %43, %47 : vector<1x1x256xf32>
      %c224_i32 = arith.constant 224 : i32
      %49 = tpu.dynamic_rotate %19 by %c224_i32 dim 2 : vector<1x1x256xf32>, i32 -> vector<1x1x256xf32>
      %c224_i32_34 = arith.constant 224 : i32
      %50 = tpu.dynamic_rotate %20 by %c224_i32_34 dim 2 : vector<1x1x256xf32>, i32 -> vector<1x1x256xf32>
      %c5 = arith.constant 5 : index
      %c0_35 = arith.constant 0 : index
      %51 = vector.load %arg3[%c5, %c0_35] : memref<14x256xf32, #tpu.memory_space<vmem>>, vector<1x256xf32>
      %52 = vector.shape_cast %51 : vector<1x256xf32> to vector<1x1x256xf32>
      %53 = arith.mulf %49, %52 : vector<1x1x256xf32>
      %54 = vector.shape_cast %51 : vector<1x256xf32> to vector<1x1x256xf32>
      %55 = arith.mulf %50, %54 : vector<1x1x256xf32>
      %c208_i32 = arith.constant 208 : i32
      %56 = tpu.dynamic_rotate %19 by %c208_i32 dim 2 : vector<1x1x256xf32>, i32 -> vector<1x1x256xf32>
      %c208_i32_36 = arith.constant 208 : i32
      %57 = tpu.dynamic_rotate %20 by %c208_i32_36 dim 2 : vector<1x1x256xf32>, i32 -> vector<1x1x256xf32>
      %c6 = arith.constant 6 : index
      %c0_37 = arith.constant 0 : index
      %58 = vector.load %arg3[%c6, %c0_37] : memref<14x256xf32, #tpu.memory_space<vmem>>, vector<1x256xf32>
      %59 = vector.shape_cast %58 : vector<1x256xf32> to vector<1x1x256xf32>
      %60 = arith.mulf %56, %59 : vector<1x1x256xf32>
      %61 = vector.shape_cast %58 : vector<1x256xf32> to vector<1x1x256xf32>
      %62 = arith.mulf %57, %61 : vector<1x1x256xf32>
      %c0_38 = arith.constant 0 : index
      %63 = memref.load %arg2[%c0_38] : memref<98xf32, #tpu.memory_space<smem>>
      %c49 = arith.constant 49 : index
      %64 = memref.load %arg2[%c49] : memref<98xf32, #tpu.memory_space<smem>>
      %65 = vector.broadcast %63 : f32 to vector<1x1x256xf32>
      %66 = arith.mulf %65, %25 : vector<1x1x256xf32>
      %67 = vector.broadcast %64 : f32 to vector<1x1x256xf32>
      %68 = arith.mulf %67, %27 : vector<1x1x256xf32>
      %69 = arith.addf %66, %68 : vector<1x1x256xf32>
      %c7 = arith.constant 7 : index
      %70 = memref.load %arg2[%c7] : memref<98xf32, #tpu.memory_space<smem>>
      %c56 = arith.constant 56 : index
      %71 = memref.load %arg2[%c56] : memref<98xf32, #tpu.memory_space<smem>>
      %72 = vector.broadcast %70 : f32 to vector<1x1x256xf32>
      %73 = arith.mulf %72, %32 : vector<1x1x256xf32>
      %74 = vector.broadcast %71 : f32 to vector<1x1x256xf32>
      %75 = arith.mulf %74, %34 : vector<1x1x256xf32>
      %76 = arith.addf %73, %75 : vector<1x1x256xf32>
      %77 = arith.addf %69, %76 : vector<1x1x256xf32>
      %c14 = arith.constant 14 : index
      %78 = memref.load %arg2[%c14] : memref<98xf32, #tpu.memory_space<smem>>
      %c63 = arith.constant 63 : index
      %79 = memref.load %arg2[%c63] : memref<98xf32, #tpu.memory_space<smem>>
      %80 = vector.broadcast %78 : f32 to vector<1x1x256xf32>
      %81 = arith.mulf %80, %39 : vector<1x1x256xf32>
      %82 = vector.broadcast %79 : f32 to vector<1x1x256xf32>
      %83 = arith.mulf %82, %41 : vector<1x1x256xf32>
      %84 = arith.addf %81, %83 : vector<1x1x256xf32>
      %85 = arith.addf %77, %84 : vector<1x1x256xf32>
      %c21 = arith.constant 21 : index
      %86 = memref.load %arg2[%c21] : memref<98xf32, #tpu.memory_space<smem>>
      %c70 = arith.constant 70 : index
      %87 = memref.load %arg2[%c70] : memref<98xf32, #tpu.memory_space<smem>>
      %88 = vector.broadcast %86 : f32 to vector<1x1x256xf32>
      %89 = arith.mulf %88, %19 : vector<1x1x256xf32>
      %90 = vector.broadcast %87 : f32 to vector<1x1x256xf32>
      %91 = arith.mulf %90, %20 : vector<1x1x256xf32>
      %92 = arith.addf %89, %91 : vector<1x1x256xf32>
      %93 = arith.addf %85, %92 : vector<1x1x256xf32>
      %c28 = arith.constant 28 : index
      %94 = memref.load %arg2[%c28] : memref<98xf32, #tpu.memory_space<smem>>
      %c77 = arith.constant 77 : index
      %95 = memref.load %arg2[%c77] : memref<98xf32, #tpu.memory_space<smem>>
      %96 = vector.broadcast %94 : f32 to vector<1x1x256xf32>
      %97 = arith.mulf %96, %46 : vector<1x1x256xf32>
      %98 = vector.broadcast %95 : f32 to vector<1x1x256xf32>
      %99 = arith.mulf %98, %48 : vector<1x1x256xf32>
      %100 = arith.addf %97, %99 : vector<1x1x256xf32>
      %101 = arith.addf %93, %100 : vector<1x1x256xf32>
      %c35 = arith.constant 35 : index
      %102 = memref.load %arg2[%c35] : memref<98xf32, #tpu.memory_space<smem>>
      %c84 = arith.constant 84 : index
      %103 = memref.load %arg2[%c84] : memref<98xf32, #tpu.memory_space<smem>>
      %104 = vector.broadcast %102 : f32 to vector<1x1x256xf32>
      %105 = arith.mulf %104, %53 : vector<1x1x256xf32>
      %106 = vector.broadcast %103 : f32 to vector<1x1x256xf32>
      %107 = arith.mulf %106, %55 : vector<1x1x256xf32>
      %108 = arith.addf %105, %107 : vector<1x1x256xf32>
      %109 = arith.addf %101, %108 : vector<1x1x256xf32>
      %c42 = arith.constant 42 : index
      %110 = memref.load %arg2[%c42] : memref<98xf32, #tpu.memory_space<smem>>
      %c91 = arith.constant 91 : index
      %111 = memref.load %arg2[%c91] : memref<98xf32, #tpu.memory_space<smem>>
      %112 = vector.broadcast %110 : f32 to vector<1x1x256xf32>
      %113 = arith.mulf %112, %60 : vector<1x1x256xf32>
      %114 = vector.broadcast %111 : f32 to vector<1x1x256xf32>
      %115 = arith.mulf %114, %62 : vector<1x1x256xf32>
      %116 = arith.addf %113, %115 : vector<1x1x256xf32>
      %117 = arith.addf %109, %116 : vector<1x1x256xf32>
      %c3_i32 = arith.constant 3 : i32
      %118 = tpu.dynamic_rotate %117 by %c3_i32 dim 2 : vector<1x1x256xf32>, i32 -> vector<1x1x256xf32>
      %c7_39 = arith.constant 7 : index
      %c0_40 = arith.constant 0 : index
      %119 = vector.load %arg3[%c7_39, %c0_40] : memref<14x256xf32, #tpu.memory_space<vmem>>, vector<1x256xf32>
      %120 = vector.shape_cast %119 : vector<1x256xf32> to vector<1x1x256xf32>
      %121 = arith.mulf %118, %120 : vector<1x1x256xf32>
      %c1_41 = arith.constant 1 : index
      %122 = memref.load %arg2[%c1_41] : memref<98xf32, #tpu.memory_space<smem>>
      %c50 = arith.constant 50 : index
      %123 = memref.load %arg2[%c50] : memref<98xf32, #tpu.memory_space<smem>>
      %124 = vector.broadcast %122 : f32 to vector<1x1x256xf32>
      %125 = arith.mulf %124, %25 : vector<1x1x256xf32>
      %126 = vector.broadcast %123 : f32 to vector<1x1x256xf32>
      %127 = arith.mulf %126, %27 : vector<1x1x256xf32>
      %128 = arith.addf %125, %127 : vector<1x1x256xf32>
      %c8 = arith.constant 8 : index
      %129 = memref.load %arg2[%c8] : memref<98xf32, #tpu.memory_space<smem>>
      %c57 = arith.constant 57 : index
      %130 = memref.load %arg2[%c57] : memref<98xf32, #tpu.memory_space<smem>>
      %131 = vector.broadcast %129 : f32 to vector<1x1x256xf32>
      %132 = arith.mulf %131, %32 : vector<1x1x256xf32>
      %133 = vector.broadcast %130 : f32 to vector<1x1x256xf32>
      %134 = arith.mulf %133, %34 : vector<1x1x256xf32>
      %135 = arith.addf %132, %134 : vector<1x1x256xf32>
      %136 = arith.addf %128, %135 : vector<1x1x256xf32>
      %c15 = arith.constant 15 : index
      %137 = memref.load %arg2[%c15] : memref<98xf32, #tpu.memory_space<smem>>
      %c64 = arith.constant 64 : index
      %138 = memref.load %arg2[%c64] : memref<98xf32, #tpu.memory_space<smem>>
      %139 = vector.broadcast %137 : f32 to vector<1x1x256xf32>
      %140 = arith.mulf %139, %39 : vector<1x1x256xf32>
      %141 = vector.broadcast %138 : f32 to vector<1x1x256xf32>
      %142 = arith.mulf %141, %41 : vector<1x1x256xf32>
      %143 = arith.addf %140, %142 : vector<1x1x256xf32>
      %144 = arith.addf %136, %143 : vector<1x1x256xf32>
      %c22 = arith.constant 22 : index
      %145 = memref.load %arg2[%c22] : memref<98xf32, #tpu.memory_space<smem>>
      %c71 = arith.constant 71 : index
      %146 = memref.load %arg2[%c71] : memref<98xf32, #tpu.memory_space<smem>>
      %147 = vector.broadcast %145 : f32 to vector<1x1x256xf32>
      %148 = arith.mulf %147, %19 : vector<1x1x256xf32>
      %149 = vector.broadcast %146 : f32 to vector<1x1x256xf32>
      %150 = arith.mulf %149, %20 : vector<1x1x256xf32>
      %151 = arith.addf %148, %150 : vector<1x1x256xf32>
      %152 = arith.addf %144, %151 : vector<1x1x256xf32>
      %c29 = arith.constant 29 : index
      %153 = memref.load %arg2[%c29] : memref<98xf32, #tpu.memory_space<smem>>
      %c78 = arith.constant 78 : index
      %154 = memref.load %arg2[%c78] : memref<98xf32, #tpu.memory_space<smem>>
      %155 = vector.broadcast %153 : f32 to vector<1x1x256xf32>
      %156 = arith.mulf %155, %46 : vector<1x1x256xf32>
      %157 = vector.broadcast %154 : f32 to vector<1x1x256xf32>
      %158 = arith.mulf %157, %48 : vector<1x1x256xf32>
      %159 = arith.addf %156, %158 : vector<1x1x256xf32>
      %160 = arith.addf %152, %159 : vector<1x1x256xf32>
      %c36 = arith.constant 36 : index
      %161 = memref.load %arg2[%c36] : memref<98xf32, #tpu.memory_space<smem>>
      %c85 = arith.constant 85 : index
      %162 = memref.load %arg2[%c85] : memref<98xf32, #tpu.memory_space<smem>>
      %163 = vector.broadcast %161 : f32 to vector<1x1x256xf32>
      %164 = arith.mulf %163, %53 : vector<1x1x256xf32>
      %165 = vector.broadcast %162 : f32 to vector<1x1x256xf32>
      %166 = arith.mulf %165, %55 : vector<1x1x256xf32>
      %167 = arith.addf %164, %166 : vector<1x1x256xf32>
      %168 = arith.addf %160, %167 : vector<1x1x256xf32>
      %c43 = arith.constant 43 : index
      %169 = memref.load %arg2[%c43] : memref<98xf32, #tpu.memory_space<smem>>
      %c92 = arith.constant 92 : index
      %170 = memref.load %arg2[%c92] : memref<98xf32, #tpu.memory_space<smem>>
      %171 = vector.broadcast %169 : f32 to vector<1x1x256xf32>
      %172 = arith.mulf %171, %60 : vector<1x1x256xf32>
      %173 = vector.broadcast %170 : f32 to vector<1x1x256xf32>
      %174 = arith.mulf %173, %62 : vector<1x1x256xf32>
      %175 = arith.addf %172, %174 : vector<1x1x256xf32>
      %176 = arith.addf %168, %175 : vector<1x1x256xf32>
      %c2_i32 = arith.constant 2 : i32
      %177 = tpu.dynamic_rotate %176 by %c2_i32 dim 2 : vector<1x1x256xf32>, i32 -> vector<1x1x256xf32>
      %c8_42 = arith.constant 8 : index
      %c0_43 = arith.constant 0 : index
      %178 = vector.load %arg3[%c8_42, %c0_43] : memref<14x256xf32, #tpu.memory_space<vmem>>, vector<1x256xf32>
      %179 = vector.shape_cast %178 : vector<1x256xf32> to vector<1x1x256xf32>
      %180 = arith.mulf %177, %179 : vector<1x1x256xf32>
      %181 = arith.addf %121, %180 : vector<1x1x256xf32>
      %c2_44 = arith.constant 2 : index
      %182 = memref.load %arg2[%c2_44] : memref<98xf32, #tpu.memory_space<smem>>
      %c51 = arith.constant 51 : index
      %183 = memref.load %arg2[%c51] : memref<98xf32, #tpu.memory_space<smem>>
      %184 = vector.broadcast %182 : f32 to vector<1x1x256xf32>
      %185 = arith.mulf %184, %25 : vector<1x1x256xf32>
      %186 = vector.broadcast %183 : f32 to vector<1x1x256xf32>
      %187 = arith.mulf %186, %27 : vector<1x1x256xf32>
      %188 = arith.addf %185, %187 : vector<1x1x256xf32>
      %c9 = arith.constant 9 : index
      %189 = memref.load %arg2[%c9] : memref<98xf32, #tpu.memory_space<smem>>
      %c58 = arith.constant 58 : index
      %190 = memref.load %arg2[%c58] : memref<98xf32, #tpu.memory_space<smem>>
      %191 = vector.broadcast %189 : f32 to vector<1x1x256xf32>
      %192 = arith.mulf %191, %32 : vector<1x1x256xf32>
      %193 = vector.broadcast %190 : f32 to vector<1x1x256xf32>
      %194 = arith.mulf %193, %34 : vector<1x1x256xf32>
      %195 = arith.addf %192, %194 : vector<1x1x256xf32>
      %196 = arith.addf %188, %195 : vector<1x1x256xf32>
      %c16 = arith.constant 16 : index
      %197 = memref.load %arg2[%c16] : memref<98xf32, #tpu.memory_space<smem>>
      %c65 = arith.constant 65 : index
      %198 = memref.load %arg2[%c65] : memref<98xf32, #tpu.memory_space<smem>>
      %199 = vector.broadcast %197 : f32 to vector<1x1x256xf32>
      %200 = arith.mulf %199, %39 : vector<1x1x256xf32>
      %201 = vector.broadcast %198 : f32 to vector<1x1x256xf32>
      %202 = arith.mulf %201, %41 : vector<1x1x256xf32>
      %203 = arith.addf %200, %202 : vector<1x1x256xf32>
      %204 = arith.addf %196, %203 : vector<1x1x256xf32>
      %c23 = arith.constant 23 : index
      %205 = memref.load %arg2[%c23] : memref<98xf32, #tpu.memory_space<smem>>
      %c72 = arith.constant 72 : index
      %206 = memref.load %arg2[%c72] : memref<98xf32, #tpu.memory_space<smem>>
      %207 = vector.broadcast %205 : f32 to vector<1x1x256xf32>
      %208 = arith.mulf %207, %19 : vector<1x1x256xf32>
      %209 = vector.broadcast %206 : f32 to vector<1x1x256xf32>
      %210 = arith.mulf %209, %20 : vector<1x1x256xf32>
      %211 = arith.addf %208, %210 : vector<1x1x256xf32>
      %212 = arith.addf %204, %211 : vector<1x1x256xf32>
      %c30 = arith.constant 30 : index
      %213 = memref.load %arg2[%c30] : memref<98xf32, #tpu.memory_space<smem>>
      %c79 = arith.constant 79 : index
      %214 = memref.load %arg2[%c79] : memref<98xf32, #tpu.memory_space<smem>>
      %215 = vector.broadcast %213 : f32 to vector<1x1x256xf32>
      %216 = arith.mulf %215, %46 : vector<1x1x256xf32>
      %217 = vector.broadcast %214 : f32 to vector<1x1x256xf32>
      %218 = arith.mulf %217, %48 : vector<1x1x256xf32>
      %219 = arith.addf %216, %218 : vector<1x1x256xf32>
      %220 = arith.addf %212, %219 : vector<1x1x256xf32>
      %c37 = arith.constant 37 : index
      %221 = memref.load %arg2[%c37] : memref<98xf32, #tpu.memory_space<smem>>
      %c86 = arith.constant 86 : index
      %222 = memref.load %arg2[%c86] : memref<98xf32, #tpu.memory_space<smem>>
      %223 = vector.broadcast %221 : f32 to vector<1x1x256xf32>
      %224 = arith.mulf %223, %53 : vector<1x1x256xf32>
      %225 = vector.broadcast %222 : f32 to vector<1x1x256xf32>
      %226 = arith.mulf %225, %55 : vector<1x1x256xf32>
      %227 = arith.addf %224, %226 : vector<1x1x256xf32>
      %228 = arith.addf %220, %227 : vector<1x1x256xf32>
      %c44 = arith.constant 44 : index
      %229 = memref.load %arg2[%c44] : memref<98xf32, #tpu.memory_space<smem>>
      %c93 = arith.constant 93 : index
      %230 = memref.load %arg2[%c93] : memref<98xf32, #tpu.memory_space<smem>>
      %231 = vector.broadcast %229 : f32 to vector<1x1x256xf32>
      %232 = arith.mulf %231, %60 : vector<1x1x256xf32>
      %233 = vector.broadcast %230 : f32 to vector<1x1x256xf32>
      %234 = arith.mulf %233, %62 : vector<1x1x256xf32>
      %235 = arith.addf %232, %234 : vector<1x1x256xf32>
      %236 = arith.addf %228, %235 : vector<1x1x256xf32>
      %c1_i32 = arith.constant 1 : i32
      %237 = tpu.dynamic_rotate %236 by %c1_i32 dim 2 : vector<1x1x256xf32>, i32 -> vector<1x1x256xf32>
      %c9_45 = arith.constant 9 : index
      %c0_46 = arith.constant 0 : index
      %238 = vector.load %arg3[%c9_45, %c0_46] : memref<14x256xf32, #tpu.memory_space<vmem>>, vector<1x256xf32>
      %239 = vector.shape_cast %238 : vector<1x256xf32> to vector<1x1x256xf32>
      %240 = arith.mulf %237, %239 : vector<1x1x256xf32>
      %241 = arith.addf %181, %240 : vector<1x1x256xf32>
      %c3 = arith.constant 3 : index
      %242 = memref.load %arg2[%c3] : memref<98xf32, #tpu.memory_space<smem>>
      %c52 = arith.constant 52 : index
      %243 = memref.load %arg2[%c52] : memref<98xf32, #tpu.memory_space<smem>>
      %244 = vector.broadcast %242 : f32 to vector<1x1x256xf32>
      %245 = arith.mulf %244, %25 : vector<1x1x256xf32>
      %246 = vector.broadcast %243 : f32 to vector<1x1x256xf32>
      %247 = arith.mulf %246, %27 : vector<1x1x256xf32>
      %248 = arith.addf %245, %247 : vector<1x1x256xf32>
      %c10 = arith.constant 10 : index
      %249 = memref.load %arg2[%c10] : memref<98xf32, #tpu.memory_space<smem>>
      %c59 = arith.constant 59 : index
      %250 = memref.load %arg2[%c59] : memref<98xf32, #tpu.memory_space<smem>>
      %251 = vector.broadcast %249 : f32 to vector<1x1x256xf32>
      %252 = arith.mulf %251, %32 : vector<1x1x256xf32>
      %253 = vector.broadcast %250 : f32 to vector<1x1x256xf32>
      %254 = arith.mulf %253, %34 : vector<1x1x256xf32>
      %255 = arith.addf %252, %254 : vector<1x1x256xf32>
      %256 = arith.addf %248, %255 : vector<1x1x256xf32>
      %c17 = arith.constant 17 : index
      %257 = memref.load %arg2[%c17] : memref<98xf32, #tpu.memory_space<smem>>
      %c66 = arith.constant 66 : index
      %258 = memref.load %arg2[%c66] : memref<98xf32, #tpu.memory_space<smem>>
      %259 = vector.broadcast %257 : f32 to vector<1x1x256xf32>
      %260 = arith.mulf %259, %39 : vector<1x1x256xf32>
      %261 = vector.broadcast %258 : f32 to vector<1x1x256xf32>
      %262 = arith.mulf %261, %41 : vector<1x1x256xf32>
      %263 = arith.addf %260, %262 : vector<1x1x256xf32>
      %264 = arith.addf %256, %263 : vector<1x1x256xf32>
      %c24 = arith.constant 24 : index
      %265 = memref.load %arg2[%c24] : memref<98xf32, #tpu.memory_space<smem>>
      %c73 = arith.constant 73 : index
      %266 = memref.load %arg2[%c73] : memref<98xf32, #tpu.memory_space<smem>>
      %267 = vector.broadcast %265 : f32 to vector<1x1x256xf32>
      %268 = arith.mulf %267, %19 : vector<1x1x256xf32>
      %269 = vector.broadcast %266 : f32 to vector<1x1x256xf32>
      %270 = arith.mulf %269, %20 : vector<1x1x256xf32>
      %271 = arith.addf %268, %270 : vector<1x1x256xf32>
      %272 = arith.addf %264, %271 : vector<1x1x256xf32>
      %c31 = arith.constant 31 : index
      %273 = memref.load %arg2[%c31] : memref<98xf32, #tpu.memory_space<smem>>
      %c80 = arith.constant 80 : index
      %274 = memref.load %arg2[%c80] : memref<98xf32, #tpu.memory_space<smem>>
      %275 = vector.broadcast %273 : f32 to vector<1x1x256xf32>
      %276 = arith.mulf %275, %46 : vector<1x1x256xf32>
      %277 = vector.broadcast %274 : f32 to vector<1x1x256xf32>
      %278 = arith.mulf %277, %48 : vector<1x1x256xf32>
      %279 = arith.addf %276, %278 : vector<1x1x256xf32>
      %280 = arith.addf %272, %279 : vector<1x1x256xf32>
      %c38 = arith.constant 38 : index
      %281 = memref.load %arg2[%c38] : memref<98xf32, #tpu.memory_space<smem>>
      %c87 = arith.constant 87 : index
      %282 = memref.load %arg2[%c87] : memref<98xf32, #tpu.memory_space<smem>>
      %283 = vector.broadcast %281 : f32 to vector<1x1x256xf32>
      %284 = arith.mulf %283, %53 : vector<1x1x256xf32>
      %285 = vector.broadcast %282 : f32 to vector<1x1x256xf32>
      %286 = arith.mulf %285, %55 : vector<1x1x256xf32>
      %287 = arith.addf %284, %286 : vector<1x1x256xf32>
      %288 = arith.addf %280, %287 : vector<1x1x256xf32>
      %c45 = arith.constant 45 : index
      %289 = memref.load %arg2[%c45] : memref<98xf32, #tpu.memory_space<smem>>
      %c94 = arith.constant 94 : index
      %290 = memref.load %arg2[%c94] : memref<98xf32, #tpu.memory_space<smem>>
      %291 = vector.broadcast %289 : f32 to vector<1x1x256xf32>
      %292 = arith.mulf %291, %60 : vector<1x1x256xf32>
      %293 = vector.broadcast %290 : f32 to vector<1x1x256xf32>
      %294 = arith.mulf %293, %62 : vector<1x1x256xf32>
      %295 = arith.addf %292, %294 : vector<1x1x256xf32>
      %296 = arith.addf %288, %295 : vector<1x1x256xf32>
      %297 = arith.addf %241, %296 : vector<1x1x256xf32>
      %c4_47 = arith.constant 4 : index
      %298 = memref.load %arg2[%c4_47] : memref<98xf32, #tpu.memory_space<smem>>
      %c53 = arith.constant 53 : index
      %299 = memref.load %arg2[%c53] : memref<98xf32, #tpu.memory_space<smem>>
      %300 = vector.broadcast %298 : f32 to vector<1x1x256xf32>
      %301 = arith.mulf %300, %25 : vector<1x1x256xf32>
      %302 = vector.broadcast %299 : f32 to vector<1x1x256xf32>
      %303 = arith.mulf %302, %27 : vector<1x1x256xf32>
      %304 = arith.addf %301, %303 : vector<1x1x256xf32>
      %c11 = arith.constant 11 : index
      %305 = memref.load %arg2[%c11] : memref<98xf32, #tpu.memory_space<smem>>
      %c60 = arith.constant 60 : index
      %306 = memref.load %arg2[%c60] : memref<98xf32, #tpu.memory_space<smem>>
      %307 = vector.broadcast %305 : f32 to vector<1x1x256xf32>
      %308 = arith.mulf %307, %32 : vector<1x1x256xf32>
      %309 = vector.broadcast %306 : f32 to vector<1x1x256xf32>
      %310 = arith.mulf %309, %34 : vector<1x1x256xf32>
      %311 = arith.addf %308, %310 : vector<1x1x256xf32>
      %312 = arith.addf %304, %311 : vector<1x1x256xf32>
      %c18 = arith.constant 18 : index
      %313 = memref.load %arg2[%c18] : memref<98xf32, #tpu.memory_space<smem>>
      %c67 = arith.constant 67 : index
      %314 = memref.load %arg2[%c67] : memref<98xf32, #tpu.memory_space<smem>>
      %315 = vector.broadcast %313 : f32 to vector<1x1x256xf32>
      %316 = arith.mulf %315, %39 : vector<1x1x256xf32>
      %317 = vector.broadcast %314 : f32 to vector<1x1x256xf32>
      %318 = arith.mulf %317, %41 : vector<1x1x256xf32>
      %319 = arith.addf %316, %318 : vector<1x1x256xf32>
      %320 = arith.addf %312, %319 : vector<1x1x256xf32>
      %c25 = arith.constant 25 : index
      %321 = memref.load %arg2[%c25] : memref<98xf32, #tpu.memory_space<smem>>
      %c74 = arith.constant 74 : index
      %322 = memref.load %arg2[%c74] : memref<98xf32, #tpu.memory_space<smem>>
      %323 = vector.broadcast %321 : f32 to vector<1x1x256xf32>
      %324 = arith.mulf %323, %19 : vector<1x1x256xf32>
      %325 = vector.broadcast %322 : f32 to vector<1x1x256xf32>
      %326 = arith.mulf %325, %20 : vector<1x1x256xf32>
      %327 = arith.addf %324, %326 : vector<1x1x256xf32>
      %328 = arith.addf %320, %327 : vector<1x1x256xf32>
      %c32 = arith.constant 32 : index
      %329 = memref.load %arg2[%c32] : memref<98xf32, #tpu.memory_space<smem>>
      %c81 = arith.constant 81 : index
      %330 = memref.load %arg2[%c81] : memref<98xf32, #tpu.memory_space<smem>>
      %331 = vector.broadcast %329 : f32 to vector<1x1x256xf32>
      %332 = arith.mulf %331, %46 : vector<1x1x256xf32>
      %333 = vector.broadcast %330 : f32 to vector<1x1x256xf32>
      %334 = arith.mulf %333, %48 : vector<1x1x256xf32>
      %335 = arith.addf %332, %334 : vector<1x1x256xf32>
      %336 = arith.addf %328, %335 : vector<1x1x256xf32>
      %c39 = arith.constant 39 : index
      %337 = memref.load %arg2[%c39] : memref<98xf32, #tpu.memory_space<smem>>
      %c88 = arith.constant 88 : index
      %338 = memref.load %arg2[%c88] : memref<98xf32, #tpu.memory_space<smem>>
      %339 = vector.broadcast %337 : f32 to vector<1x1x256xf32>
      %340 = arith.mulf %339, %53 : vector<1x1x256xf32>
      %341 = vector.broadcast %338 : f32 to vector<1x1x256xf32>
      %342 = arith.mulf %341, %55 : vector<1x1x256xf32>
      %343 = arith.addf %340, %342 : vector<1x1x256xf32>
      %344 = arith.addf %336, %343 : vector<1x1x256xf32>
      %c46 = arith.constant 46 : index
      %345 = memref.load %arg2[%c46] : memref<98xf32, #tpu.memory_space<smem>>
      %c95 = arith.constant 95 : index
      %346 = memref.load %arg2[%c95] : memref<98xf32, #tpu.memory_space<smem>>
      %347 = vector.broadcast %345 : f32 to vector<1x1x256xf32>
      %348 = arith.mulf %347, %60 : vector<1x1x256xf32>
      %349 = vector.broadcast %346 : f32 to vector<1x1x256xf32>
      %350 = arith.mulf %349, %62 : vector<1x1x256xf32>
      %351 = arith.addf %348, %350 : vector<1x1x256xf32>
      %352 = arith.addf %344, %351 : vector<1x1x256xf32>
      %c255_i32 = arith.constant 255 : i32
      %353 = tpu.dynamic_rotate %352 by %c255_i32 dim 2 : vector<1x1x256xf32>, i32 -> vector<1x1x256xf32>
      %c11_48 = arith.constant 11 : index
      %c0_49 = arith.constant 0 : index
      %354 = vector.load %arg3[%c11_48, %c0_49] : memref<14x256xf32, #tpu.memory_space<vmem>>, vector<1x256xf32>
      %355 = vector.shape_cast %354 : vector<1x256xf32> to vector<1x1x256xf32>
      %356 = arith.mulf %353, %355 : vector<1x1x256xf32>
      %357 = arith.addf %297, %356 : vector<1x1x256xf32>
      %c5_50 = arith.constant 5 : index
      %358 = memref.load %arg2[%c5_50] : memref<98xf32, #tpu.memory_space<smem>>
      %c54 = arith.constant 54 : index
      %359 = memref.load %arg2[%c54] : memref<98xf32, #tpu.memory_space<smem>>
      %360 = vector.broadcast %358 : f32 to vector<1x1x256xf32>
      %361 = arith.mulf %360, %25 : vector<1x1x256xf32>
      %362 = vector.broadcast %359 : f32 to vector<1x1x256xf32>
      %363 = arith.mulf %362, %27 : vector<1x1x256xf32>
      %364 = arith.addf %361, %363 : vector<1x1x256xf32>
      %c12 = arith.constant 12 : index
      %365 = memref.load %arg2[%c12] : memref<98xf32, #tpu.memory_space<smem>>
      %c61 = arith.constant 61 : index
      %366 = memref.load %arg2[%c61] : memref<98xf32, #tpu.memory_space<smem>>
      %367 = vector.broadcast %365 : f32 to vector<1x1x256xf32>
      %368 = arith.mulf %367, %32 : vector<1x1x256xf32>
      %369 = vector.broadcast %366 : f32 to vector<1x1x256xf32>
      %370 = arith.mulf %369, %34 : vector<1x1x256xf32>
      %371 = arith.addf %368, %370 : vector<1x1x256xf32>
      %372 = arith.addf %364, %371 : vector<1x1x256xf32>
      %c19 = arith.constant 19 : index
      %373 = memref.load %arg2[%c19] : memref<98xf32, #tpu.memory_space<smem>>
      %c68 = arith.constant 68 : index
      %374 = memref.load %arg2[%c68] : memref<98xf32, #tpu.memory_space<smem>>
      %375 = vector.broadcast %373 : f32 to vector<1x1x256xf32>
      %376 = arith.mulf %375, %39 : vector<1x1x256xf32>
      %377 = vector.broadcast %374 : f32 to vector<1x1x256xf32>
      %378 = arith.mulf %377, %41 : vector<1x1x256xf32>
      %379 = arith.addf %376, %378 : vector<1x1x256xf32>
      %380 = arith.addf %372, %379 : vector<1x1x256xf32>
      %c26 = arith.constant 26 : index
      %381 = memref.load %arg2[%c26] : memref<98xf32, #tpu.memory_space<smem>>
      %c75 = arith.constant 75 : index
      %382 = memref.load %arg2[%c75] : memref<98xf32, #tpu.memory_space<smem>>
      %383 = vector.broadcast %381 : f32 to vector<1x1x256xf32>
      %384 = arith.mulf %383, %19 : vector<1x1x256xf32>
      %385 = vector.broadcast %382 : f32 to vector<1x1x256xf32>
      %386 = arith.mulf %385, %20 : vector<1x1x256xf32>
      %387 = arith.addf %384, %386 : vector<1x1x256xf32>
      %388 = arith.addf %380, %387 : vector<1x1x256xf32>
      %c33 = arith.constant 33 : index
      %389 = memref.load %arg2[%c33] : memref<98xf32, #tpu.memory_space<smem>>
      %c82 = arith.constant 82 : index
      %390 = memref.load %arg2[%c82] : memref<98xf32, #tpu.memory_space<smem>>
      %391 = vector.broadcast %389 : f32 to vector<1x1x256xf32>
      %392 = arith.mulf %391, %46 : vector<1x1x256xf32>
      %393 = vector.broadcast %390 : f32 to vector<1x1x256xf32>
      %394 = arith.mulf %393, %48 : vector<1x1x256xf32>
      %395 = arith.addf %392, %394 : vector<1x1x256xf32>
      %396 = arith.addf %388, %395 : vector<1x1x256xf32>
      %c40 = arith.constant 40 : index
      %397 = memref.load %arg2[%c40] : memref<98xf32, #tpu.memory_space<smem>>
      %c89 = arith.constant 89 : index
      %398 = memref.load %arg2[%c89] : memref<98xf32, #tpu.memory_space<smem>>
      %399 = vector.broadcast %397 : f32 to vector<1x1x256xf32>
      %400 = arith.mulf %399, %53 : vector<1x1x256xf32>
      %401 = vector.broadcast %398 : f32 to vector<1x1x256xf32>
      %402 = arith.mulf %401, %55 : vector<1x1x256xf32>
      %403 = arith.addf %400, %402 : vector<1x1x256xf32>
      %404 = arith.addf %396, %403 : vector<1x1x256xf32>
      %c47 = arith.constant 47 : index
      %405 = memref.load %arg2[%c47] : memref<98xf32, #tpu.memory_space<smem>>
      %c96 = arith.constant 96 : index
      %406 = memref.load %arg2[%c96] : memref<98xf32, #tpu.memory_space<smem>>
      %407 = vector.broadcast %405 : f32 to vector<1x1x256xf32>
      %408 = arith.mulf %407, %60 : vector<1x1x256xf32>
      %409 = vector.broadcast %406 : f32 to vector<1x1x256xf32>
      %410 = arith.mulf %409, %62 : vector<1x1x256xf32>
      %411 = arith.addf %408, %410 : vector<1x1x256xf32>
      %412 = arith.addf %404, %411 : vector<1x1x256xf32>
      %c254_i32 = arith.constant 254 : i32
      %413 = tpu.dynamic_rotate %412 by %c254_i32 dim 2 : vector<1x1x256xf32>, i32 -> vector<1x1x256xf32>
      %c12_51 = arith.constant 12 : index
      %c0_52 = arith.constant 0 : index
      %414 = vector.load %arg3[%c12_51, %c0_52] : memref<14x256xf32, #tpu.memory_space<vmem>>, vector<1x256xf32>
      %415 = vector.shape_cast %414 : vector<1x256xf32> to vector<1x1x256xf32>
      %416 = arith.mulf %413, %415 : vector<1x1x256xf32>
      %417 = arith.addf %357, %416 : vector<1x1x256xf32>
      %c6_53 = arith.constant 6 : index
      %418 = memref.load %arg2[%c6_53] : memref<98xf32, #tpu.memory_space<smem>>
      %c55 = arith.constant 55 : index
      %419 = memref.load %arg2[%c55] : memref<98xf32, #tpu.memory_space<smem>>
      %420 = vector.broadcast %418 : f32 to vector<1x1x256xf32>
      %421 = arith.mulf %420, %25 : vector<1x1x256xf32>
      %422 = vector.broadcast %419 : f32 to vector<1x1x256xf32>
      %423 = arith.mulf %422, %27 : vector<1x1x256xf32>
      %424 = arith.addf %421, %423 : vector<1x1x256xf32>
      %c13 = arith.constant 13 : index
      %425 = memref.load %arg2[%c13] : memref<98xf32, #tpu.memory_space<smem>>
      %c62 = arith.constant 62 : index
      %426 = memref.load %arg2[%c62] : memref<98xf32, #tpu.memory_space<smem>>
      %427 = vector.broadcast %425 : f32 to vector<1x1x256xf32>
      %428 = arith.mulf %427, %32 : vector<1x1x256xf32>
      %429 = vector.broadcast %426 : f32 to vector<1x1x256xf32>
      %430 = arith.mulf %429, %34 : vector<1x1x256xf32>
      %431 = arith.addf %428, %430 : vector<1x1x256xf32>
      %432 = arith.addf %424, %431 : vector<1x1x256xf32>
      %c20 = arith.constant 20 : index
      %433 = memref.load %arg2[%c20] : memref<98xf32, #tpu.memory_space<smem>>
      %c69 = arith.constant 69 : index
      %434 = memref.load %arg2[%c69] : memref<98xf32, #tpu.memory_space<smem>>
      %435 = vector.broadcast %433 : f32 to vector<1x1x256xf32>
      %436 = arith.mulf %435, %39 : vector<1x1x256xf32>
      %437 = vector.broadcast %434 : f32 to vector<1x1x256xf32>
      %438 = arith.mulf %437, %41 : vector<1x1x256xf32>
      %439 = arith.addf %436, %438 : vector<1x1x256xf32>
      %440 = arith.addf %432, %439 : vector<1x1x256xf32>
      %c27 = arith.constant 27 : index
      %441 = memref.load %arg2[%c27] : memref<98xf32, #tpu.memory_space<smem>>
      %c76 = arith.constant 76 : index
      %442 = memref.load %arg2[%c76] : memref<98xf32, #tpu.memory_space<smem>>
      %443 = vector.broadcast %441 : f32 to vector<1x1x256xf32>
      %444 = arith.mulf %443, %19 : vector<1x1x256xf32>
      %445 = vector.broadcast %442 : f32 to vector<1x1x256xf32>
      %446 = arith.mulf %445, %20 : vector<1x1x256xf32>
      %447 = arith.addf %444, %446 : vector<1x1x256xf32>
      %448 = arith.addf %440, %447 : vector<1x1x256xf32>
      %c34 = arith.constant 34 : index
      %449 = memref.load %arg2[%c34] : memref<98xf32, #tpu.memory_space<smem>>
      %c83 = arith.constant 83 : index
      %450 = memref.load %arg2[%c83] : memref<98xf32, #tpu.memory_space<smem>>
      %451 = vector.broadcast %449 : f32 to vector<1x1x256xf32>
      %452 = arith.mulf %451, %46 : vector<1x1x256xf32>
      %453 = vector.broadcast %450 : f32 to vector<1x1x256xf32>
      %454 = arith.mulf %453, %48 : vector<1x1x256xf32>
      %455 = arith.addf %452, %454 : vector<1x1x256xf32>
      %456 = arith.addf %448, %455 : vector<1x1x256xf32>
      %c41 = arith.constant 41 : index
      %457 = memref.load %arg2[%c41] : memref<98xf32, #tpu.memory_space<smem>>
      %c90 = arith.constant 90 : index
      %458 = memref.load %arg2[%c90] : memref<98xf32, #tpu.memory_space<smem>>
      %459 = vector.broadcast %457 : f32 to vector<1x1x256xf32>
      %460 = arith.mulf %459, %53 : vector<1x1x256xf32>
      %461 = vector.broadcast %458 : f32 to vector<1x1x256xf32>
      %462 = arith.mulf %461, %55 : vector<1x1x256xf32>
      %463 = arith.addf %460, %462 : vector<1x1x256xf32>
      %464 = arith.addf %456, %463 : vector<1x1x256xf32>
      %c48 = arith.constant 48 : index
      %465 = memref.load %arg2[%c48] : memref<98xf32, #tpu.memory_space<smem>>
      %c97 = arith.constant 97 : index
      %466 = memref.load %arg2[%c97] : memref<98xf32, #tpu.memory_space<smem>>
      %467 = vector.broadcast %465 : f32 to vector<1x1x256xf32>
      %468 = arith.mulf %467, %60 : vector<1x1x256xf32>
      %469 = vector.broadcast %466 : f32 to vector<1x1x256xf32>
      %470 = arith.mulf %469, %62 : vector<1x1x256xf32>
      %471 = arith.addf %468, %470 : vector<1x1x256xf32>
      %472 = arith.addf %464, %471 : vector<1x1x256xf32>
      %c253_i32 = arith.constant 253 : i32
      %473 = tpu.dynamic_rotate %472 by %c253_i32 dim 2 : vector<1x1x256xf32>, i32 -> vector<1x1x256xf32>
      %c13_54 = arith.constant 13 : index
      %c0_55 = arith.constant 0 : index
      %474 = vector.load %arg3[%c13_54, %c0_55] : memref<14x256xf32, #tpu.memory_space<vmem>>, vector<1x256xf32>
      %475 = vector.shape_cast %474 : vector<1x256xf32> to vector<1x1x256xf32>
      %476 = arith.mulf %473, %475 : vector<1x1x256xf32>
      %477 = arith.addf %417, %476 : vector<1x1x256xf32>
      %478 = arith.negf %477 : vector<1x1x256xf32>
      %479 = math.exp %478 : vector<1x1x256xf32>
      %cst_56 = arith.constant 1.000000e+00 : f32
      %480 = vector.broadcast %cst_56 : f32 to vector<1x1x256xf32>
      %481 = arith.addf %480, %479 : vector<1x1x256xf32>
      %482 = arith.divf %480, %481 : vector<1x1x256xf32>
      %c0_57 = arith.constant 0 : index
      %c0_58 = arith.constant 0 : index
      %c0_59 = arith.constant 0 : index
      %483 = vector.load %arg5[%c0_57, %c0_58, %c0_59] : memref<1x1x256xf32, #tpu.memory_space<vmem>>, vector<1x1x256xf32>
      tpu.vector_store %arg5[%c0_57, %c0_58, %c0_59], %482 {strides = array<i32>} : memref<1x1x256xf32, #tpu.memory_space<vmem>>, vector<1x1x256xf32>,
    } else {
    }
    return
  }
  func.func @transform_0(%arg0: i32, %arg1: i32) -> i32 {
    %c0_i32 = arith.constant 0 : i32
    %c0_i32_0 = arith.constant 0 : i32
    return %c0_i32 : i32
  }
  func.func @transform_1(%arg0: i32, %arg1: i32) -> (i32, i32) {
    %c0_i32 = arith.constant 0 : i32
    %c0_i32_0 = arith.constant 0 : i32
    %c0_i32_1 = arith.constant 0 : i32
    return %c0_i32, %c0_i32_0 : i32, i32
  }
  func.func @transform_2(%arg0: i32, %arg1: i32) -> (i32, i32, i32) {
    %c0_i32 = arith.constant 0 : i32
    %c0_i32_0 = arith.constant 0 : i32
    return %arg0, %arg1, %c0_i32 : i32, i32, i32
  }
  func.func @transform_3(%arg0: i32, %arg1: i32) -> (i32, i32, i32) {
    %c0_i32 = arith.constant 0 : i32
    %c0_i32_0 = arith.constant 0 : i32
    %c0_i32_1 = arith.constant 0 : i32
    return %arg0, %c0_i32, %c0_i32_0 : i32, i32, i32
  }
}

</mosaic_0001>

<llo_original>
// kernel: tpu_custom_call.1
$region0: #{tpu_custom_call.1}
  #allocation0 [shape = 'u32[]', space=smem, size = 0x4, offset = 0x4, fixed_abs, tag = 'smem constant byte address 0x4 - core index']
  #allocation1 [shape = 'u32[144,128]{1,0:T(1,128)}', space=vmem, size = 0x12000, scoped, tag = 'internal scratch']
  #allocation2 [shape = 'f32[1,1,256]{2,1,0:T(1,128)}', space=vmem, size = 0x400, scoped, tag = 'scratch operand']
  #allocation3 [shape = 'f32[1,1,256]{2,1,0:T(1,128)}', space=vmem, size = 0x400, scoped, tag = 'scratch operand']
  %s0 = inlined_call_operand.hbm [shape: f32[98], index: 0, kind: input, shape index: {}]
  %s1 = inlined_call_operand.hbm [shape: f32[14,256], index: 1, kind: input, shape index: {}]
  %s2 = inlined_call_operand.hbm [shape: f32[2,4,256], index: 2, kind: input, shape index: {}]
  %s3 = inlined_call_operand.hbm [shape: f32[2,1,256], index: 3, kind: output, shape index: {}]
  %s4 = sld [smem:[#allocation0]]
  $region65: #{tpu_custom_call.1} parent=0
    _
  %s6 = ssub.s32 1, %s4
  %s7 = scalar_select 0, %s6, %s4
  $region1: #{tpu_custom_call.1} parent=0
    #allocation4 [shape = 'u8[512]{0}', space=smem, size = 0x200, scoped, tag = 'input window, operand 0, single buffered']
    #allocation5 [shape = 's32[2]{0}', space=sflag, size = 0x8, scoped, tag = 'scoped memory for tpu_custom_call.1']
    #allocation6 [shape = 's32[2]{0}', space=sflag, size = 0x8, scoped, tag = 'scoped memory for tpu_custom_call.1']
    #allocation7 [shape = 's32[2]{0}', space=sflag, size = 0x8, scoped, tag = 'scoped memory for tpu_custom_call.1']
    #allocation8 [shape = 'u8[16384]{0}', space=vmem, size = 0x4000, scoped, tag = 'input window, operand 1, single buffered']
    #allocation9 [shape = 'u8[8192]{0}', space=vmem, size = 0x2000, scoped, tag = 'input window, operand 2']
    #allocation10 [shape = 's32[2]{0}', space=sflag, size = 0x8, scoped, tag = 'scoped memory for tpu_custom_call.1']
    #allocation11 [shape = 'u8[2048]{0}', space=vmem, size = 0x800, scoped, tag = 'output window, operand 0']
    %8 = vsyncpa [#allocation7], 0
    %9 = vsyncpa [#allocation5], 0
    %10 = vsyncpa [#allocation10], 0
    %s11 = scalar_lea.sflag [#allocation10], 1
    %12 = vsyncpa %s11, 0
    %13 = vsyncpa [#allocation6], 0
    %s14 = scalar_lea.sflag [#allocation6], 1
    %15 = vsyncpa %s14, 0
    loop: start=0, step=1, limit=4
    $region2: #{tpu_custom_call.1} parent=1 // loop_pre_header
      _
    $region3: #{tpu_custom_call.1} parent=1 // loop_header
      %s17 = sphi 0, %s21
      %p18 = scmp.ge.s32.totalorder %s17, 4
      %s24 = sphi 0, %s36
      %s25 = sphi 0, %s32
      %s26 = sphi 0, %s24
      %s27 = sphi 0, %s25
      %s28 = sphi 0, %s26
      %s29 = sphi 0, %s27
      %s37 = sphi 0, %s37
      %s39 = sphi 0, %s37
      %s40 = sphi 0, %s39
      %s54 = sphi 0, %s40
      %s58 = sphi 0, %s58
      %s60 = sphi 0, %s58
      %s61 = sphi 0, %s60
      %s75 = sphi 0, %s61
      %s83 = sphi 0, %s85
      %s86 = sphi 0, %s83
      %s87 = sphi 0, %s86
      %s103 = sphi 0, %s87
      %s109 = sphi 0, %s111
      %s112 = sphi 0, %s109
      %s113 = sphi 0, %s112
      %s129 = sphi 0, %s113
    $region4: #{tpu_custom_call.1} parent=1 // loop_header_branch
      %20 = sbr.rel (%p18) target = $region8
    $region5: #{tpu_custom_call.1} parent=1 // loop_body
      %s22 = ssub.s32 %s17, 1
      %s23 = ssub.s32 %s17, 2
      %s30 = sadd.s32 1, %s25
      %p31 = scmp.ge.s32.totalorder %s30, 1
      %s32 = scalar_select %p31, 0, %s30
      %s33 = sadd.s32 1, %s24
      %s34 = scalar_select %p31, %s33, %s24
      %p35 = scmp.ge.s32.totalorder %s34, 2
      %s36 = scalar_select %p35, 0, %s34
      %s38 = sadd.s32 %s37, 1
      %p41 = scmp.eq.s32.totalorder %s17, 1
      %p42 = scmp.ne.s32.totalorder %s37, %s39
      %p43 = scmp.eq.s32.totalorder %s17, 0
      %p44 = por %p42, %p43
      %p45 = scmp.ne.s32.totalorder %s37, %s39
      %p46 = scmp.eq.s32.totalorder %s22, 1
      %p47 = por %p45, %p46
      %p48 = scmp.ne.s32.totalorder %s39, %s40
      %p49 = scmp.eq.s32.totalorder %s22, 0
      %p50 = por %p48, %p49
      %p51 = scmp.ne.s32.totalorder %s39, %s40
      %p52 = scmp.eq.s32.totalorder %s23, 1
      %p53 = por %p51, %p52
      %p55 = scmp.ne.s32.totalorder %s40, %s54
      %p56 = scmp.eq.s32.totalorder %s23, 0
      %p57 = por %p55, %p56
      %s59 = sadd.s32 %s58, 1
      %p62 = scmp.eq.s32.totalorder %s17, 1
      %p63 = scmp.ne.s32.totalorder %s58, %s60
      %p64 = scmp.eq.s32.totalorder %s17, 0
      %p65 = por %p63, %p64
      %p66 = scmp.ne.s32.totalorder %s58, %s60
      %p67 = scmp.eq.s32.totalorder %s22, 1
      %p68 = por %p66, %p67
      %p69 = scmp.ne.s32.totalorder %s60, %s61
      %p70 = scmp.eq.s32.totalorder %s22, 0
      %p71 = por %p69, %p70
      %p72 = scmp.ne.s32.totalorder %s60, %s61
      %p73 = scmp.eq.s32.totalorder %s23, 1
      %p74 = por %p72, %p73
      %p76 = scmp.ne.s32.totalorder %s61, %s75
      %p77 = scmp.eq.s32.totalorder %s23, 0
      %p78 = por %p76, %p77
      %s79 = ssub.s32 %s24, %s36
      %s80 = ssub.s32 %s25, %s32
      %s81 = sor.u32 %s79, %s80
      %p82 = scmp.eq.s32.totalorder %s81, 0
      %s84 = sadd.s32 %s83, 1
      %s85 = scalar_select %p82, %s83, %s84
      %p88 = pneg %p82
      %p89 = scmp.eq.s32.totalorder %s17, 1
      %p90 = por %p88, %p89
      %p91 = scmp.ne.s32.totalorder %s83, %s86
      %p92 = scmp.eq.s32.totalorder %s17, 0
      %p93 = por %p91, %p92
      %p94 = scmp.ne.s32.totalorder %s83, %s86
      %p95 = scmp.eq.s32.totalorder %s22, 1
      %p96 = por %p94, %p95
      %p97 = scmp.ne.s32.totalorder %s86, %s87
      %p98 = scmp.eq.s32.totalorder %s22, 0
      %p99 = por %p97, %p98
      %p100 = scmp.ne.s32.totalorder %s86, %s87
      %p101 = scmp.eq.s32.totalorder %s23, 1
      %p102 = por %p100, %p101
      %p104 = scmp.ne.s32.totalorder %s87, %s103
      %p105 = scmp.eq.s32.totalorder %s23, 0
      %p106 = por %p104, %p105
      %s107 = ssub.s32 %s24, %s36
      %p108 = scmp.eq.s32.totalorder %s107, 0
      %s110 = sadd.s32 %s109, 1
      %s111 = scalar_select %p108, %s109, %s110
      %p114 = pneg %p108
      %p115 = scmp.eq.s32.totalorder %s17, 1
      %p116 = por %p114, %p115
      %p117 = scmp.ne.s32.totalorder %s109, %s112
      %p118 = scmp.eq.s32.totalorder %s17, 0
      %p119 = por %p117, %p118
      %p120 = scmp.ne.s32.totalorder %s109, %s112
      %p121 = scmp.eq.s32.totalorder %s22, 1
      %p122 = por %p120, %p121
      %p123 = scmp.ne.s32.totalorder %s112, %s113
      %p124 = scmp.eq.s32.totalorder %s22, 0
      %p125 = por %p123, %p124
      %p126 = scmp.ne.s32.totalorder %s112, %s113
      %p127 = scmp.eq.s32.totalorder %s23, 1
      %p128 = por %p126, %p127
      %p130 = scmp.ne.s32.totalorder %s113, %s129
      %p131 = scmp.eq.s32.totalorder %s23, 0
      %p132 = por %p130, %p131
      %p133 = scmp.le.s32.totalorder 1, %s17
      %p134 = scmp.lt.s32.totalorder %s17, 3
      %p135 = pnand %p133, %p134
      %p136 = pneg %p135
      // Predicated region
      $region9: #{tpu_custom_call.1} parent=5 // pred_check
        _
      $region10: #{tpu_custom_call.1} parent=5 // pred_check_branch
        %138 = sbr.rel (%p135) target = $region12
      $region11: #{tpu_custom_call.1} parent=5 // pred_region
        %s139 = ssub.s32 %s17, 1
        // Predicated region
        $region13: #{tpu_custom_call.1} parent=11 // pred_check
          %p140 = pneg %p50
        $region14: #{tpu_custom_call.1} parent=11 // pred_check_branch
          %142 = sbr.rel (%p140) target = $region16
        $region15: #{tpu_custom_call.1} parent=11 // pred_region
          %s144 = ssub.s32 16, 16
          %145 = vsyncadd [#allocation7], %s144
          %148 = dma.hbm_to_smem %s0, 16, [#allocation4], [#allocation7]
        $region16: #{tpu_custom_call.1} parent=11 // pred_fallthru
          _
        // Predicated region
        $region17: #{tpu_custom_call.1} parent=11 // pred_check
          %p149 = pneg %p71
        $region18: #{tpu_custom_call.1} parent=11 // pred_check_branch
          %151 = sbr.rel (%p149) target = $region20
        $region19: #{tpu_custom_call.1} parent=11 // pred_region
          %s153 = ssub.s32 512, 512
          %154 = vsyncadd [#allocation5], %s153
          %s155 = sshll.u32 [#allocation8], 4
          %s156 = int_to_ptr.vmem [resolvable:$true] %s155
          %161 = dma.hbm_to_vmem [thread:$0]  %s1, 512, %s156, [#allocation5], 256, 256, 16
        $region20: #{tpu_custom_call.1} parent=11 // pred_fallthru
          _
      $region12: #{tpu_custom_call.1} parent=5 // pred_fallthru
        _
      %p162 = scmp.lt.s32.totalorder %s17, 2
      // Predicated region
      $region21: #{tpu_custom_call.1} parent=5 // pred_check
        %p163 = pneg %p162
      $region22: #{tpu_custom_call.1} parent=5 // pred_check_branch
        %165 = sbr.rel (%p163) target = $region24
      $region23: #{tpu_custom_call.1} parent=5 // pred_region
        // Predicated region
        $region25: #{tpu_custom_call.1} parent=23 // pred_check
          %p166 = pneg %p93
        $region26: #{tpu_custom_call.1} parent=23 // pred_check_branch
          %168 = sbr.rel (%p166) target = $region28
        $region27: #{tpu_custom_call.1} parent=23 // pred_region
          %s169 = sand.u32 %s83, 1
          %s170 = scalar_lea.sflag [#allocation10], %s169
          %s171 = sand.u32 %s83, 1
          %s172 = smul.addr %s171, 8
          %s173 = scalar_lea.vmem [#allocation9], %s172
          %s175 = ssub.s32 128, 128
          %176 = vsyncadd %s170, %s175
          %s177 = smul.addr %s25, 2
          %s178 = smul.addr %s24, 2
          %s179 = sadd.s32 %s177, %s178
          %s180 = smul.addr %s179, 64
          %s181 = scalar_lea.hbm %s2, %s180
          %s183 = sshll.u32 %s173, 4
          %s184 = int_to_ptr.vmem [resolvable:$true] %s183
          %186 = dma.hbm_to_vmem [thread:$0]  %s181, 128, %s184, %s170
        $region28: #{tpu_custom_call.1} parent=23 // pred_fallthru
          _
      $region24: #{tpu_custom_call.1} parent=5 // pred_fallthru
        _
      %p187 = scmp.le.s32.totalorder 1, %s17
      %p188 = scmp.lt.s32.totalorder %s17, 3
      %p189 = pnand %p187, %p188
      %p190 = pneg %p189
      // Predicated region
      $region29: #{tpu_custom_call.1} parent=5 // pred_check
        _
      $region30: #{tpu_custom_call.1} parent=5 // pred_check_branch
        %192 = sbr.rel (%p189) target = $region32
      $region31: #{tpu_custom_call.1} parent=5 // pred_region
        %s193 = ssub.s32 %s17, 1
        // Predicated region
        $region33: #{tpu_custom_call.1} parent=31 // pred_check
          %p194 = pneg %p50
        $region34: #{tpu_custom_call.1} parent=31 // pred_check_branch
          %196 = sbr.rel (%p194) target = $region36
        $region35: #{tpu_custom_call.1} parent=31 // pred_region
          %197 = dma.done [#allocation7], 16
        $region36: #{tpu_custom_call.1} parent=31 // pred_fallthru
          _
        // Predicated region
        $region37: #{tpu_custom_call.1} parent=31 // pred_check
          %p198 = pneg %p71
        $region38: #{tpu_custom_call.1} parent=31 // pred_check_branch
          %200 = sbr.rel (%p198) target = $region40
        $region39: #{tpu_custom_call.1} parent=31 // pred_region
          %201 = dma.done [#allocation5], 512
        $region40: #{tpu_custom_call.1} parent=31 // pred_fallthru
          _
        %s202 = sand.u32 %s86, 1
        %s203 = scalar_lea.sflag [#allocation10], %s202
        %s204 = sand.u32 %s86, 1
        %s205 = smul.addr %s204, 8
        %s206 = scalar_lea.vmem [#allocation9], %s205
        // Predicated region
        $region41: #{tpu_custom_call.1} parent=31 // pred_check
          %p207 = pneg %p99
        $region42: #{tpu_custom_call.1} parent=31 // pred_check_branch
          %209 = sbr.rel (%p207) target = $region44
        $region43: #{tpu_custom_call.1} parent=31 // pred_region
          %210 = dma.done %s203, 128
        $region44: #{tpu_custom_call.1} parent=31 // pred_fallthru
          _
        %211 = sfence
        %p212 = pneg %p50
        %p213 = pneg %p47
        %p214 = pneg %p71
        %p215 = pneg %p68
        %s216 = sand.u32 %s86, 1
        %s217 = scalar_lea.sflag [#allocation10], %s216
        %s218 = sand.u32 %s86, 1
        %s219 = smul.addr %s218, 8
        %s220 = scalar_lea.vmem [#allocation9], %s219
        %p221 = pneg %p99
        %p222 = pneg %p96
        %p223 = pneg %p125
        %p224 = pneg %p122
        %s225 = sand.u32 %s112, 1
        %s226 = scalar_lea.sflag [#allocation6], %s225
        %s227 = sand.u32 %s112, 1
        %s228 = smul.addr %s227, 2
        %s229 = scalar_lea.vmem [#allocation11], %s228
        %p230 = scmp.eq.s32.totalorder %s27, 0
        // Predicated region
        $region45: #{tpu_custom_call.1} parent=31 // pred_check
          %p231 = pneg %p230
        $region46: #{tpu_custom_call.1} parent=31 // pred_check_branch
          %233 = sbr.rel (%p231) target = $region48
        $region47: #{tpu_custom_call.1} parent=31 // pred_region
          %v234 = vlaneseq
          %vm235 = vcmp.ge.s32.totalorder %v234, 0
          %vm236 = vcmp.lt.s32.totalorder %v234, 256
          %vm237 = vmand %vm235, %vm236
          %238 = vst.msk [vmem:[#allocation2] sm:$0x3] %vm237, 0.0
          %239 = vst.msk [vmem:[#allocation3] sm:$0x3] %vm237, -inf
        $region48: #{tpu_custom_call.1} parent=31 // pred_fallthru
          _
        %v240 = vld [vmem:[%s206] sm:$0xff]
        %v241 = vld [vmem:[#allocation2] sm:$0x3]
        %v243 = vcombine.high %v240, %v240
        %vm245 = vcmask 1043456
        %v246 = vsel %vm245, %v240, 0.0
        %v247 = vrot.slane %v246, 4
        %v248 = vadd.f32 %v246, %v247
        %v249 = vrot.slane %v248, 2
        %v250 = vadd.f32 %v248, %v249
        %v251 = vrot.slane %v250, 1
        %v252 = vadd.f32 %v250, %v251
        %v253 = vsel %vm245, %v243, 0.0
        %v254 = vrot.slane %v253, 4
        %v255 = vadd.f32 %v253, %v254
        %v256 = vrot.slane %v255, 2
        %v257 = vadd.f32 %v255, %v256
        %v258 = vrot.slane %v257, 1
        %v259 = vadd.f32 %v257, %v258
        %v262 = vcombine.low %v252, %v259
        %v264 = vunpack.c.l.s4 1966171168
        %v265 = vunpack.c.0.s8 %v264
        %v266 = vlaneseq
        %v267 = vshrl.u32 %v266, 7
        %v268 = vsub.s32 %v265, %v267
        %v269 = vrot.slane %v262, %v268
        %v271 = vunpack.c.l.s4 1966171168
        %v272 = vunpack.c.0.s8 %v271
        %v273 = vlaneseq
        %v274 = vshrl.u32 %v273, 7
        %v275 = vsub.s32 %v272, %v274
        %v276 = vrot.slane %v269, %v275
        %v278 = vadd.f32 %v241, %v276
        %v279 = vlaneseq
        %vm280 = vcmp.ge.s32.totalorder %v279, 0
        %vm281 = vcmp.lt.s32.totalorder %v279, 256
        %vm282 = vmand %vm280, %vm281
        %283 = vst.msk [vmem:[#allocation2] sm:$0x3] %vm282, %v278
        %v284 = vld [vmem:[#allocation3] sm:$0x3]
        %v285 = vsel %vm245, %v240, -inf
        %v286 = vrot.slane %v285, 4
        %v287 = vmax.f32 %v285, %v286
        %v288 = vrot.slane %v287, 2
        %v289 = vmax.f32 %v287, %v288
        %v290 = vrot.slane %v289, 1
        %v291 = vmax.f32 %v289, %v290
        %v292 = vsel %vm245, %v243, -inf
        %v293 = vrot.slane %v292, 4
        %v294 = vmax.f32 %v292, %v293
        %v295 = vrot.slane %v294, 2
        %v296 = vmax.f32 %v294, %v295
        %v297 = vrot.slane %v296, 1
        %v298 = vmax.f32 %v296, %v297
        %v301 = vcombine.low %v291, %v298
        %v303 = vunpack.c.l.s4 1966171168
        %v304 = vunpack.c.0.s8 %v303
        %v305 = vlaneseq
        %v306 = vshrl.u32 %v305, 7
        %v307 = vsub.s32 %v304, %v306
        %v308 = vrot.slane %v301, %v307
        %v310 = vunpack.c.l.s4 1966171168
        %v311 = vunpack.c.0.s8 %v310
        %v312 = vlaneseq
        %v313 = vshrl.u32 %v312, 7
        %v314 = vsub.s32 %v311, %v313
        %v315 = vrot.slane %v308, %v314
        %v317 = vmax.f32 %v284, %v315
        %318 = vst.msk [vmem:[#allocation3] sm:$0x3] %vm282, %v317
        // Predicated region
        $region49: #{tpu_custom_call.1} parent=31 // pred_check
          %p319 = pneg %p230
        $region50: #{tpu_custom_call.1} parent=31 // pred_check_branch
          %321 = sbr.rel (%p319) target = $region52
        $region51: #{tpu_custom_call.1} parent=31 // pred_region
          %v322 = vld [vmem:[#allocation2] sm:$0x3]
          %v323 = vmul.f32 %v322, 0.25
          %v324 = vld [vmem:[#allocation3] sm:$0x3]
          %v326 = vlaneseq
          %v327 = vshrl.u32 %v326, 7
          %v328 = vsub.s32 0, %v327
          %v329 = vrot.slane %v323, %v328
          %v330 = vlaneseq
          %v331 = vshrl.u32 %v330, 7
          %v332 = vsub.s32 1, %v331
          %v333 = vrot.slane %v323, %v332
          %336 = vrot.lane.b32.xlu0 %v329, 48
          %v337 = vpop.permute.xlu0 %336
          %338 = vrot.lane.b32.xlu0 %v333, 48
          %v339 = vpop.permute.xlu0 %338
          %v340 = vlaneseq
          %v341 = vand.u32 %v340, 127
          %vm342 = vcmp.lt.s32.totalorder %v341, 48
          %v343 = vsel %vm342, %v337, %v339
          %v344 = vsel %vm342, %v339, %v337
          %v346 = vlaneseq
          %v347 = vshrl.u32 %v346, 7
          %v348 = vsub.s32 0, %v347
          %v349 = vrot.slane %v324, %v348
          %v350 = vlaneseq
          %v351 = vshrl.u32 %v350, 7
          %v352 = vsub.s32 1, %v351
          %v353 = vrot.slane %v324, %v352
          %356 = vrot.lane.b32.xlu0 %v349, 48
          %v357 = vpop.permute.xlu0 %356
          %358 = vrot.lane.b32.xlu0 %v353, 48
          %v359 = vpop.permute.xlu0 %358
          %v360 = vsel %vm342, %v357, %v359
          %v361 = vsel %vm342, %v359, %v357
          %v362 = vld [vmem:[#allocation8] ss:$8 sm:$0x3]
          %v364 = vlaneseq
          %v365 = vshrl.u32 %v364, 7
          %v366 = vsub.s32 0, %v365
          %v367 = vrot.slane %v362, %v366
          %v368 = vlaneseq
          %v369 = vshrl.u32 %v368, 7
          %v370 = vsub.s32 1, %v369
          %v371 = vrot.slane %v362, %v370
          %v374 = vmul.f32 %v344, %v367
          %v375 = vmul.f32 %v343, %v371
          %v376 = vmul.f32 %v361, %v367
          %v377 = vmul.f32 %v360, %v371
          %378 = vrot.lane.b32.xlu0 %v329, 32
          %v379 = vpop.permute.xlu0 %378
          %380 = vrot.lane.b32.xlu0 %v333, 32
          %v381 = vpop.permute.xlu0 %380
          %vm382 = vcmp.lt.s32.totalorder %v341, 32
          %v383 = vsel %vm382, %v379, %v381
          %v384 = vsel %vm382, %v381, %v379
          %385 = vrot.lane.b32.xlu0 %v349, 32
          %v386 = vpop.permute.xlu0 %385
          %387 = vrot.lane.b32.xlu0 %v353, 32
          %v388 = vpop.permute.xlu0 %387
          %v389 = vsel %vm382, %v386, %v388
          %v390 = vsel %vm382, %v388, %v386
          %s391 = scalar_lea.vmem [#allocation8], 1
          %v392 = vld [vmem:[%s391] ss:$8 sm:$0x3]
          %v394 = vlaneseq
          %v395 = vshrl.u32 %v394, 7
          %v396 = vsub.s32 0, %v395
          %v397 = vrot.slane %v392, %v396
          %v398 = vlaneseq
          %v399 = vshrl.u32 %v398, 7
          %v400 = vsub.s32 1, %v399
          %v401 = vrot.slane %v392, %v400
          %v404 = vmul.f32 %v384, %v397
          %v405 = vmul.f32 %v383, %v401
          %v406 = vmul.f32 %v390, %v397
          %v407 = vmul.f32 %v389, %v401
          %408 = vrot.lane.b32.xlu0 %v329, 16
          %v409 = vpop.permute.xlu0 %408
          %410 = vrot.lane.b32.xlu0 %v333, 16
          %v411 = vpop.permute.xlu0 %410
          %vm412 = vcmp.lt.s32.totalorder %v341, 16
          %v413 = vsel %vm412, %v409, %v411
          %v414 = vsel %vm412, %v411, %v409
          %415 = vrot.lane.b32.xlu0 %v349, 16
          %v416 = vpop.permute.xlu0 %415
          %417 = vrot.lane.b32.xlu0 %v353, 16
          %v418 = vpop.permute.xlu0 %417
          %v419 = vsel %vm412, %v416, %v418
          %v420 = vsel %vm412, %v418, %v416
          %s421 = scalar_lea.vmem [#allocation8], 2
          %v422 = vld [vmem:[%s421] ss:$8 sm:$0x3]
          %v424 = vlaneseq
          %v425 = vshrl.u32 %v424, 7
          %v426 = vsub.s32 0, %v425
          %v427 = vrot.slane %v422, %v426
          %v428 = vlaneseq
          %v429 = vshrl.u32 %v428, 7
          %v430 = vsub.s32 1, %v429
          %v431 = vrot.slane %v422, %v430
          %v434 = vmul.f32 %v414, %v427
          %v435 = vmul.f32 %v413, %v431
          %v436 = vmul.f32 %v420, %v427
          %v437 = vmul.f32 %v419, %v431
          %438 = vrot.lane.b32.xlu0 %v329, 112
          %v439 = vpop.permute.xlu0 %438
          %440 = vrot.lane.b32.xlu0 %v333, 112
          %v441 = vpop.permute.xlu0 %440
          %vm442 = vcmp.lt.s32.totalorder %v341, 112
          %v443 = vsel %vm442, %v439, %v441
          %v444 = vsel %vm442, %v441, %v439
          %445 = vrot.lane.b32.xlu0 %v349, 112
          %v446 = vpop.permute.xlu0 %445
          %447 = vrot.lane.b32.xlu0 %v353, 112
          %v448 = vpop.permute.xlu0 %447
          %v449 = vsel %vm442, %v446, %v448
          %v450 = vsel %vm442, %v448, %v446
          %s451 = scalar_lea.vmem [#allocation8], 4
          %v452 = vld [vmem:[%s451] ss:$8 sm:$0x3]
          %v454 = vlaneseq
          %v455 = vshrl.u32 %v454, 7
          %v456 = vsub.s32 0, %v455
          %v457 = vrot.slane %v452, %v456
          %v458 = vlaneseq
          %v459 = vshrl.u32 %v458, 7
          %v460 = vsub.s32 1, %v459
          %v461 = vrot.slane %v452, %v460
          %v464 = vmul.f32 %v443, %v457
          %v465 = vmul.f32 %v444, %v461
          %v466 = vmul.f32 %v449, %v457
          %v467 = vmul.f32 %v450, %v461
          %468 = vrot.lane.b32.xlu0 %v329, 96
          %v469 = vpop.permute.xlu0 %468
          %470 = vrot.lane.b32.xlu0 %v333, 96
          %v471 = vpop.permute.xlu0 %470
          %vm472 = vcmp.lt.s32.totalorder %v341, 96
          %v473 = vsel %vm472, %v469, %v471
          %v474 = vsel %vm472, %v471, %v469
          %475 = vrot.lane.b32.xlu0 %v349, 96
          %v476 = vpop.permute.xlu0 %475
          %477 = vrot.lane.b32.xlu0 %v353, 96
          %v478 = vpop.permute.xlu0 %477
          %v479 = vsel %vm472, %v476, %v478
          %v480 = vsel %vm472, %v478, %v476
          %s481 = scalar_lea.vmem [#allocation8], 5
          %v482 = vld [vmem:[%s481] ss:$8 sm:$0x3]
          %v484 = vlaneseq
          %v485 = vshrl.u32 %v484, 7
          %v486 = vsub.s32 0, %v485
          %v487 = vrot.slane %v482, %v486
          %v488 = vlaneseq
          %v489 = vshrl.u32 %v488, 7
          %v490 = vsub.s32 1, %v489
          %v491 = vrot.slane %v482, %v490
          %v494 = vmul.f32 %v473, %v487
          %v495 = vmul.f32 %v474, %v491
          %v496 = vmul.f32 %v479, %v487
          %v497 = vmul.f32 %v480, %v491
          %498 = vrot.lane.b32.xlu0 %v329, 80
          %v499 = vpop.permute.xlu0 %498
          %500 = vrot.lane.b32.xlu0 %v333, 80
          %v501 = vpop.permute.xlu0 %500
          %vm502 = vcmp.lt.s32.totalorder %v341, 80
          %v503 = vsel %vm502, %v499, %v501
          %v504 = vsel %vm502, %v501, %v499
          %505 = vrot.lane.b32.xlu0 %v349, 80
          %v506 = vpop.permute.xlu0 %505
          %507 = vrot.lane.b32.xlu0 %v353, 80
          %v508 = vpop.permute.xlu0 %507
          %v509 = vsel %vm502, %v506, %v508
          %v510 = vsel %vm502, %v508, %v506
          %s511 = scalar_lea.vmem [#allocation8], 6
          %v512 = vld [vmem:[%s511] ss:$8 sm:$0x3]
          %v514 = vlaneseq
          %v515 = vshrl.u32 %v514, 7
          %v516 = vsub.s32 0, %v515
          %v517 = vrot.slane %v512, %v516
          %v518 = vlaneseq
          %v519 = vshrl.u32 %v518, 7
          %v520 = vsub.s32 1, %v519
          %v521 = vrot.slane %v512, %v520
          %v524 = vmul.f32 %v503, %v517
          %v525 = vmul.f32 %v504, %v521
          %v526 = vmul.f32 %v509, %v517
          %v527 = vmul.f32 %v510, %v521
          %s528 = sld [smem:[#allocation4]]
          %s529 = sld [smem:[#allocation4 + $0x31]]
          %v530 = vstv %s528
          %v531 = vmul.f32 %v530, %v374
          %v532 = vmul.f32 %v530, %v375
          %v533 = vstv %s529
          %v534 = vmul.f32 %v533, %v376
          %v535 = vmul.f32 %v533, %v377
          %v536 = vadd.f32 %v531, %v534
          %v537 = vadd.f32 %v532, %v535
          %s538 = sld [smem:[#allocation4 + $0x7]]
          %s539 = sld [smem:[#allocation4 + $0x38]]
          %v540 = vstv %s538
          %v541 = vmul.f32 %v540, %v404
          %v542 = vmul.f32 %v540, %v405
          %v543 = vstv %s539
          %v544 = vmul.f32 %v543, %v406
          %v545 = vmul.f32 %v543, %v407
          %v546 = vadd.f32 %v541, %v544
          %v547 = vadd.f32 %v542, %v545
          %v548 = vadd.f32 %v536, %v546
          %v549 = vadd.f32 %v537, %v547
          %s550 = sld [smem:[#allocation4 + $0xe]]
          %s551 = sld [smem:[#allocation4 + $0x3f]]
          %v552 = vstv %s550
          %v553 = vmul.f32 %v552, %v434
          %v554 = vmul.f32 %v552, %v435
          %v555 = vstv %s551
          %v556 = vmul.f32 %v555, %v436
          %v557 = vmul.f32 %v555, %v437
          %v558 = vadd.f32 %v553, %v556
          %v559 = vadd.f32 %v554, %v557
          %v560 = vadd.f32 %v548, %v558
          %v561 = vadd.f32 %v549, %v559
          %s562 = sld [smem:[#allocation4 + $0x15]]
          %s563 = sld [smem:[#allocation4 + $0x46]]
          %v564 = vstv %s562
          %v565 = vmul.f32 %v564, %v323
          %v566 = vstv %s563
          %v567 = vmul.f32 %v566, %v324
          %v568 = vadd.f32 %v565, %v567
          %v570 = vlaneseq
          %v571 = vshrl.u32 %v570, 7
          %v572 = vsub.s32 0, %v571
          %v573 = vrot.slane %v568, %v572
          %v574 = vlaneseq
          %v575 = vshrl.u32 %v574, 7
          %v576 = vsub.s32 1, %v575
          %v577 = vrot.slane %v568, %v576
          %v580 = vadd.f32 %v560, %v573
          %v581 = vadd.f32 %v561, %v577
          %s582 = sld [smem:[#allocation4 + $0x1c]]
          %s583 = sld [smem:[#allocation4 + $0x4d]]
          %v584 = vstv %s582
          %v585 = vmul.f32 %v584, %v464
          %v586 = vmul.f32 %v584, %v465
          %v587 = vstv %s583
          %v588 = vmul.f32 %v587, %v466
          %v589 = vmul.f32 %v587, %v467
          %v590 = vadd.f32 %v585, %v588
          %v591 = vadd.f32 %v586, %v589
          %v592 = vadd.f32 %v580, %v590
          %v593 = vadd.f32 %v581, %v591
          %s594 = sld [smem:[#allocation4 + $0x23]]
          %s595 = sld [smem:[#allocation4 + $0x54]]
          %v596 = vstv %s594
          %v597 = vmul.f32 %v596, %v494
          %v598 = vmul.f32 %v596, %v495
          %v599 = vstv %s595
          %v600 = vmul.f32 %v599, %v496
          %v601 = vmul.f32 %v599, %v497
          %v602 = vadd.f32 %v597, %v600
          %v603 = vadd.f32 %v598, %v601
          %v604 = vadd.f32 %v592, %v602
          %v605 = vadd.f32 %v593, %v603
          %s606 = sld [smem:[#allocation4 + $0x2a]]
          %s607 = sld [smem:[#allocation4 + $0x5b]]
          %v608 = vstv %s606
          %v609 = vmul.f32 %v608, %v524
          %v610 = vmul.f32 %v608, %v525
          %v611 = vstv %s607
          %v612 = vmul.f32 %v611, %v526
          %v613 = vmul.f32 %v611, %v527
          %v614 = vadd.f32 %v609, %v612
          %v615 = vadd.f32 %v610, %v613
          %v616 = vadd.f32 %v604, %v614
          %v617 = vadd.f32 %v605, %v615
          %618 = vrot.lane.b32.xlu0 %v616, 3
          %v619 = vpop.permute.xlu0 %618
          %620 = vrot.lane.b32.xlu0 %v617, 3
          %v621 = vpop.permute.xlu0 %620
          %vm622 = vcmp.lt.s32.totalorder %v341, 3
          %v623 = vsel %vm622, %v619, %v621
          %v624 = vsel %vm622, %v621, %v619
          %s625 = scalar_lea.vmem [#allocation8], 7
          %v626 = vld [vmem:[%s625] ss:$8 sm:$0x3]
          %v628 = vlaneseq
          %v629 = vshrl.u32 %v628, 7
          %v630 = vsub.s32 0, %v629
          %v631 = vrot.slane %v626, %v630
          %v632 = vlaneseq
          %v633 = vshrl.u32 %v632, 7
          %v634 = vsub.s32 1, %v633
          %v635 = vrot.slane %v626, %v634
          %v638 = vmul.f32 %v624, %v631
          %v639 = vmul.f32 %v623, %v635
          %s640 = sld [smem:[#allocation4 + $0x1]]
          %s641 = sld [smem:[#allocation4 + $0x32]]
          %v642 = vstv %s640
          %v643 = vmul.f32 %v642, %v374
          %v644 = vmul.f32 %v642, %v375
          %v645 = vstv %s641
          %v646 = vmul.f32 %v645, %v376
          %v647 = vmul.f32 %v645, %v377
          %v648 = vadd.f32 %v643, %v646
          %v649 = vadd.f32 %v644, %v647
          %s650 = sld [smem:[#allocation4 + $0x8]]
          %s651 = sld [smem:[#allocation4 + $0x39]]
          %v652 = vstv %s650
          %v653 = vmul.f32 %v652, %v404
          %v654 = vmul.f32 %v652, %v405
          %v655 = vstv %s651
          %v656 = vmul.f32 %v655, %v406
          %v657 = vmul.f32 %v655, %v407
          %v658 = vadd.f32 %v653, %v656
          %v659 = vadd.f32 %v654, %v657
          %v660 = vadd.f32 %v648, %v658
          %v661 = vadd.f32 %v649, %v659
          %s662 = sld [smem:[#allocation4 + $0xf]]
          %s663 = sld [smem:[#allocation4 + $0x40]]
          %v664 = vstv %s662
          %v665 = vmul.f32 %v664, %v434
          %v666 = vmul.f32 %v664, %v435
          %v667 = vstv %s663
          %v668 = vmul.f32 %v667, %v436
          %v669 = vmul.f32 %v667, %v437
          %v670 = vadd.f32 %v665, %v668
          %v671 = vadd.f32 %v666, %v669
          %v672 = vadd.f32 %v660, %v670
          %v673 = vadd.f32 %v661, %v671
          %s674 = sld [smem:[#allocation4 + $0x16]]
          %s675 = sld [smem:[#allocation4 + $0x47]]
          %v676 = vstv %s674
          %v677 = vmul.f32 %v676, %v323
          %v678 = vstv %s675
          %v679 = vmul.f32 %v678, %v324
          %v680 = vadd.f32 %v677, %v679
          %v682 = vlaneseq
          %v683 = vshrl.u32 %v682, 7
          %v684 = vsub.s32 0, %v683
          %v685 = vrot.slane %v680, %v684
          %v686 = vlaneseq
          %v687 = vshrl.u32 %v686, 7
          %v688 = vsub.s32 1, %v687
          %v689 = vrot.slane %v680, %v688
          %v692 = vadd.f32 %v672, %v685
          %v693 = vadd.f32 %v673, %v689
          %s694 = sld [smem:[#allocation4 + $0x1d]]
          %s695 = sld [smem:[#allocation4 + $0x4e]]
          %v696 = vstv %s694
          %v697 = vmul.f32 %v696, %v464
          %v698 = vmul.f32 %v696, %v465
          %v699 = vstv %s695
          %v700 = vmul.f32 %v699, %v466
          %v701 = vmul.f32 %v699, %v467
          %v702 = vadd.f32 %v697, %v700
          %v703 = vadd.f32 %v698, %v701
          %v704 = vadd.f32 %v692, %v702
          %v705 = vadd.f32 %v693, %v703
          %s706 = sld [smem:[#allocation4 + $0x24]]
          %s707 = sld [smem:[#allocation4 + $0x55]]
          %v708 = vstv %s706
          %v709 = vmul.f32 %v708, %v494
          %v710 = vmul.f32 %v708, %v495
          %v711 = vstv %s707
          %v712 = vmul.f32 %v711, %v496
          %v713 = vmul.f32 %v711, %v497
          %v714 = vadd.f32 %v709, %v712
          %v715 = vadd.f32 %v710, %v713
          %v716 = vadd.f32 %v704, %v714
          %v717 = vadd.f32 %v705, %v715
          %s718 = sld [smem:[#allocation4 + $0x2b]]
          %s719 = sld [smem:[#allocation4 + $0x5c]]
          %v720 = vstv %s718
          %v721 = vmul.f32 %v720, %v524
          %v722 = vmul.f32 %v720, %v525
          %v723 = vstv %s719
          %v724 = vmul.f32 %v723, %v526
          %v725 = vmul.f32 %v723, %v527
          %v726 = vadd.f32 %v721, %v724
          %v727 = vadd.f32 %v722, %v725
          %v728 = vadd.f32 %v716, %v726
          %v729 = vadd.f32 %v717, %v727
          %730 = vrot.lane.b32.xlu0 %v728, 2
          %v731 = vpop.permute.xlu0 %730
          %732 = vrot.lane.b32.xlu0 %v729, 2
          %v733 = vpop.permute.xlu0 %732
          %vm734 = vcmp.lt.s32.totalorder %v341, 2
          %v735 = vsel %vm734, %v731, %v733
          %v736 = vsel %vm734, %v733, %v731
          %s737 = scalar_lea.vmem [#allocation8], 16
          %v738 = vld [vmem:[%s737] ss:$8 sm:$0x3]
          %v740 = vlaneseq
          %v741 = vshrl.u32 %v740, 7
          %v742 = vsub.s32 0, %v741
          %v743 = vrot.slane %v738, %v742
          %v744 = vlaneseq
          %v745 = vshrl.u32 %v744, 7
          %v746 = vsub.s32 1, %v745
          %v747 = vrot.slane %v738, %v746
          %v750 = vmul.f32 %v736, %v743
          %v751 = vmul.f32 %v735, %v747
          %v752 = vadd.f32 %v638, %v750
          %v753 = vadd.f32 %v639, %v751
          %s754 = sld [smem:[#allocation4 + $0x2]]
          %s755 = sld [smem:[#allocation4 + $0x33]]
          %v756 = vstv %s754
          %v757 = vmul.f32 %v756, %v374
          %v758 = vmul.f32 %v756, %v375
          %v759 = vstv %s755
          %v760 = vmul.f32 %v759, %v376
          %v761 = vmul.f32 %v759, %v377
          %v762 = vadd.f32 %v757, %v760
          %v763 = vadd.f32 %v758, %v761
          %s764 = sld [smem:[#allocation4 + $0x9]]
          %s765 = sld [smem:[#allocation4 + $0x3a]]
          %v766 = vstv %s764
          %v767 = vmul.f32 %v766, %v404
          %v768 = vmul.f32 %v766, %v405
          %v769 = vstv %s765
          %v770 = vmul.f32 %v769, %v406
          %v771 = vmul.f32 %v769, %v407
          %v772 = vadd.f32 %v767, %v770
          %v773 = vadd.f32 %v768, %v771
          %v774 = vadd.f32 %v762, %v772
          %v775 = vadd.f32 %v763, %v773
          %s776 = sld [smem:[#allocation4 + $0x10]]
          %s777 = sld [smem:[#allocation4 + $0x41]]
          %v778 = vstv %s776
          %v779 = vmul.f32 %v778, %v434
          %v780 = vmul.f32 %v778, %v435
          %v781 = vstv %s777
          %v782 = vmul.f32 %v781, %v436
          %v783 = vmul.f32 %v781, %v437
          %v784 = vadd.f32 %v779, %v782
          %v785 = vadd.f32 %v780, %v783
          %v786 = vadd.f32 %v774, %v784
          %v787 = vadd.f32 %v775, %v785
          %s788 = sld [smem:[#allocation4 + $0x17]]
          %s789 = sld [smem:[#allocation4 + $0x48]]
          %v790 = vstv %s788
          %v791 = vmul.f32 %v790, %v323
          %v792 = vstv %s789
          %v793 = vmul.f32 %v792, %v324
          %v794 = vadd.f32 %v791, %v793
          %v796 = vlaneseq
          %v797 = vshrl.u32 %v796, 7
          %v798 = vsub.s32 0, %v797
          %v799 = vrot.slane %v794, %v798
          %v800 = vlaneseq
          %v801 = vshrl.u32 %v800, 7
          %v802 = vsub.s32 1, %v801
          %v803 = vrot.slane %v794, %v802
          %v806 = vadd.f32 %v786, %v799
          %v807 = vadd.f32 %v787, %v803
          %s808 = sld [smem:[#allocation4 + $0x1e]]
          %s809 = sld [smem:[#allocation4 + $0x4f]]
          %v810 = vstv %s808
          %v811 = vmul.f32 %v810, %v464
          %v812 = vmul.f32 %v810, %v465
          %v813 = vstv %s809
          %v814 = vmul.f32 %v813, %v466
          %v815 = vmul.f32 %v813, %v467
          %v816 = vadd.f32 %v811, %v814
          %v817 = vadd.f32 %v812, %v815
          %v818 = vadd.f32 %v806, %v816
          %v819 = vadd.f32 %v807, %v817
          %s820 = sld [smem:[#allocation4 + $0x25]]
          %s821 = sld [smem:[#allocation4 + $0x56]]
          %v822 = vstv %s820
          %v823 = vmul.f32 %v822, %v494
          %v824 = vmul.f32 %v822, %v495
          %v825 = vstv %s821
          %v826 = vmul.f32 %v825, %v496
          %v827 = vmul.f32 %v825, %v497
          %v828 = vadd.f32 %v823, %v826
          %v829 = vadd.f32 %v824, %v827
          %v830 = vadd.f32 %v818, %v828
          %v831 = vadd.f32 %v819, %v829
          %s832 = sld [smem:[#allocation4 + $0x2c]]
          %s833 = sld [smem:[#allocation4 + $0x5d]]
          %v834 = vstv %s832
          %v835 = vmul.f32 %v834, %v524
          %v836 = vmul.f32 %v834, %v525
          %v837 = vstv %s833
          %v838 = vmul.f32 %v837, %v526
          %v839 = vmul.f32 %v837, %v527
          %v840 = vadd.f32 %v835, %v838
          %v841 = vadd.f32 %v836, %v839
          %v842 = vadd.f32 %v830, %v840
          %v843 = vadd.f32 %v831, %v841
          %844 = vrot.lane.b32.xlu0 %v842, 1
          %v845 = vpop.permute.xlu0 %844
          %846 = vrot.lane.b32.xlu0 %v843, 1
          %v847 = vpop.permute.xlu0 %846
          %vm848 = vcmp.lt.s32.totalorder %v341, 1
          %v849 = vsel %vm848, %v845, %v847
          %v850 = vsel %vm848, %v847, %v845
          %s851 = scalar_lea.vmem [#allocation8], 17
          %v852 = vld [vmem:[%s851] ss:$8 sm:$0x3]
          %v854 = vlaneseq
          %v855 = vshrl.u32 %v854, 7
          %v856 = vsub.s32 0, %v855
          %v857 = vrot.slane %v852, %v856
          %v858 = vlaneseq
          %v859 = vshrl.u32 %v858, 7
          %v860 = vsub.s32 1, %v859
          %v861 = vrot.slane %v852, %v860
          %v864 = vmul.f32 %v850, %v857
          %v865 = vmul.f32 %v849, %v861
          %v866 = vadd.f32 %v752, %v864
          %v867 = vadd.f32 %v753, %v865
          %s868 = sld [smem:[#allocation4 + $0x3]]
          %s869 = sld [smem:[#allocation4 + $0x34]]
          %v870 = vstv %s868
          %v871 = vmul.f32 %v870, %v374
          %v872 = vmul.f32 %v870, %v375
          %v873 = vstv %s869
          %v874 = vmul.f32 %v873, %v376
          %v875 = vmul.f32 %v873, %v377
          %v876 = vadd.f32 %v871, %v874
          %v877 = vadd.f32 %v872, %v875
          %s878 = sld [smem:[#allocation4 + $0xa]]
          %s879 = sld [smem:[#allocation4 + $0x3b]]
          %v880 = vstv %s878
          %v881 = vmul.f32 %v880, %v404
          %v882 = vmul.f32 %v880, %v405
          %v883 = vstv %s879
          %v884 = vmul.f32 %v883, %v406
          %v885 = vmul.f32 %v883, %v407
          %v886 = vadd.f32 %v881, %v884
          %v887 = vadd.f32 %v882, %v885
          %v888 = vadd.f32 %v876, %v886
          %v889 = vadd.f32 %v877, %v887
          %s890 = sld [smem:[#allocation4 + $0x11]]
          %s891 = sld [smem:[#allocation4 + $0x42]]
          %v892 = vstv %s890
          %v893 = vmul.f32 %v892, %v434
          %v894 = vmul.f32 %v892, %v435
          %v895 = vstv %s891
          %v896 = vmul.f32 %v895, %v436
          %v897 = vmul.f32 %v895, %v437
          %v898 = vadd.f32 %v893, %v896
          %v899 = vadd.f32 %v894, %v897
          %v900 = vadd.f32 %v888, %v898
          %v901 = vadd.f32 %v889, %v899
          %s902 = sld [smem:[#allocation4 + $0x18]]
          %s903 = sld [smem:[#allocation4 + $0x49]]
          %v904 = vstv %s902
          %v905 = vmul.f32 %v904, %v323
          %v906 = vstv %s903
          %v907 = vmul.f32 %v906, %v324
          %v908 = vadd.f32 %v905, %v907
          %v910 = vlaneseq
          %v911 = vshrl.u32 %v910, 7
          %v912 = vsub.s32 0, %v911
          %v913 = vrot.slane %v908, %v912
          %v914 = vlaneseq
          %v915 = vshrl.u32 %v914, 7
          %v916 = vsub.s32 1, %v915
          %v917 = vrot.slane %v908, %v916
          %v920 = vadd.f32 %v900, %v913
          %v921 = vadd.f32 %v901, %v917
          %s922 = sld [smem:[#allocation4 + $0x1f]]
          %s923 = sld [smem:[#allocation4 + $0x50]]
          %v924 = vstv %s922
          %v925 = vmul.f32 %v924, %v464
          %v926 = vmul.f32 %v924, %v465
          %v927 = vstv %s923
          %v928 = vmul.f32 %v927, %v466
          %v929 = vmul.f32 %v927, %v467
          %v930 = vadd.f32 %v925, %v928
          %v931 = vadd.f32 %v926, %v929
          %v932 = vadd.f32 %v920, %v930
          %v933 = vadd.f32 %v921, %v931
          %s934 = sld [smem:[#allocation4 + $0x26]]
          %s935 = sld [smem:[#allocation4 + $0x57]]
          %v936 = vstv %s934
          %v937 = vmul.f32 %v936, %v494
          %v938 = vmul.f32 %v936, %v495
          %v939 = vstv %s935
          %v940 = vmul.f32 %v939, %v496
          %v941 = vmul.f32 %v939, %v497
          %v942 = vadd.f32 %v937, %v940
          %v943 = vadd.f32 %v938, %v941
          %v944 = vadd.f32 %v932, %v942
          %v945 = vadd.f32 %v933, %v943
          %s946 = sld [smem:[#allocation4 + $0x2d]]
          %s947 = sld [smem:[#allocation4 + $0x5e]]
          %v948 = vstv %s946
          %v949 = vmul.f32 %v948, %v524
          %v950 = vmul.f32 %v948, %v525
          %v951 = vstv %s947
          %v952 = vmul.f32 %v951, %v526
          %v953 = vmul.f32 %v951, %v527
          %v954 = vadd.f32 %v949, %v952
          %v955 = vadd.f32 %v950, %v953
          %v956 = vadd.f32 %v944, %v954
          %v957 = vadd.f32 %v945, %v955
          %v958 = vadd.f32 %v866, %v956
          %v959 = vadd.f32 %v867, %v957
          %s960 = sld [smem:[#allocation4 + $0x4]]
          %s961 = sld [smem:[#allocation4 + $0x35]]
          %v962 = vstv %s960
          %v963 = vmul.f32 %v962, %v374
          %v964 = vmul.f32 %v962, %v375
          %v965 = vstv %s961
          %v966 = vmul.f32 %v965, %v376
          %v967 = vmul.f32 %v965, %v377
          %v968 = vadd.f32 %v963, %v966
          %v969 = vadd.f32 %v964, %v967
          %s970 = sld [smem:[#allocation4 + $0xb]]
          %s971 = sld [smem:[#allocation4 + $0x3c]]
          %v972 = vstv %s970
          %v973 = vmul.f32 %v972, %v404
          %v974 = vmul.f32 %v972, %v405
          %v975 = vstv %s971
          %v976 = vmul.f32 %v975, %v406
          %v977 = vmul.f32 %v975, %v407
          %v978 = vadd.f32 %v973, %v976
          %v979 = vadd.f32 %v974, %v977
          %v980 = vadd.f32 %v968, %v978
          %v981 = vadd.f32 %v969, %v979
          %s982 = sld [smem:[#allocation4 + $0x12]]
          %s983 = sld [smem:[#allocation4 + $0x43]]
          %v984 = vstv %s982
          %v985 = vmul.f32 %v984, %v434
          %v986 = vmul.f32 %v984, %v435
          %v987 = vstv %s983
          %v988 = vmul.f32 %v987, %v436
          %v989 = vmul.f32 %v987, %v437
          %v990 = vadd.f32 %v985, %v988
          %v991 = vadd.f32 %v986, %v989
          %v992 = vadd.f32 %v980, %v990
          %v993 = vadd.f32 %v981, %v991
          %s994 = sld [smem:[#allocation4 + $0x19]]
          %s995 = sld [smem:[#allocation4 + $0x4a]]
          %v996 = vstv %s994
          %v997 = vmul.f32 %v996, %v323
          %v998 = vstv %s995
          %v999 = vmul.f32 %v998, %v324
          %v1000 = vadd.f32 %v997, %v999
          %v1002 = vlaneseq
          %v1003 = vshrl.u32 %v1002, 7
          %v1004 = vsub.s32 0, %v1003
          %v1005 = vrot.slane %v1000, %v1004
          %v1006 = vlaneseq
          %v1007 = vshrl.u32 %v1006, 7
          %v1008 = vsub.s32 1, %v1007
          %v1009 = vrot.slane %v1000, %v1008
          %v1012 = vadd.f32 %v992, %v1005
          %v1013 = vadd.f32 %v993, %v1009
          %s1014 = sld [smem:[#allocation4 + $0x20]]
          %s1015 = sld [smem:[#allocation4 + $0x51]]
          %v1016 = vstv %s1014
          %v1017 = vmul.f32 %v1016, %v464
          %v1018 = vmul.f32 %v1016, %v465
          %v1019 = vstv %s1015
          %v1020 = vmul.f32 %v1019, %v466
          %v1021 = vmul.f32 %v1019, %v467
          %v1022 = vadd.f32 %v1017, %v1020
          %v1023 = vadd.f32 %v1018, %v1021
          %v1024 = vadd.f32 %v1012, %v1022
          %v1025 = vadd.f32 %v1013, %v1023
          %s1026 = sld [smem:[#allocation4 + $0x27]]
          %s1027 = sld [smem:[#allocation4 + $0x58]]
          %v1028 = vstv %s1026
          %v1029 = vmul.f32 %v1028, %v494
          %v1030 = vmul.f32 %v1028, %v495
          %v1031 = vstv %s1027
          %v1032 = vmul.f32 %v1031, %v496
          %v1033 = vmul.f32 %v1031, %v497
          %v1034 = vadd.f32 %v1029, %v1032
          %v1035 = vadd.f32 %v1030, %v1033
          %v1036 = vadd.f32 %v1024, %v1034
          %v1037 = vadd.f32 %v1025, %v1035
          %s1038 = sld [smem:[#allocation4 + $0x2e]]
          %s1039 = sld [smem:[#allocation4 + $0x5f]]
          %v1040 = vstv %s1038
          %v1041 = vmul.f32 %v1040, %v524
          %v1042 = vmul.f32 %v1040, %v525
          %v1043 = vstv %s1039
          %v1044 = vmul.f32 %v1043, %v526
          %v1045 = vmul.f32 %v1043, %v527
          %v1046 = vadd.f32 %v1041, %v1044
          %v1047 = vadd.f32 %v1042, %v1045
          %v1048 = vadd.f32 %v1036, %v1046
          %v1049 = vadd.f32 %v1037, %v1047
          %1050 = vrot.lane.b32.xlu0 %v1048, 127
          %v1051 = vpop.permute.xlu0 %1050
          %1052 = vrot.lane.b32.xlu0 %v1049, 127
          %v1053 = vpop.permute.xlu0 %1052
          %vm1054 = vcmp.lt.s32.totalorder %v341, 127
          %v1055 = vsel %vm1054, %v1051, %v1053
          %v1056 = vsel %vm1054, %v1053, %v1051
          %s1057 = scalar_lea.vmem [#allocation8], 19
          %v1058 = vld [vmem:[%s1057] ss:$8 sm:$0x3]
          %v1060 = vlaneseq
          %v1061 = vshrl.u32 %v1060, 7
          %v1062 = vsub.s32 0, %v1061
          %v1063 = vrot.slane %v1058, %v1062
          %v1064 = vlaneseq
          %v1065 = vshrl.u32 %v1064, 7
          %v1066 = vsub.s32 1, %v1065
          %v1067 = vrot.slane %v1058, %v1066
          %v1070 = vmul.f32 %v1055, %v1063
          %v1071 = vmul.f32 %v1056, %v1067
          %v1072 = vadd.f32 %v958, %v1070
          %v1073 = vadd.f32 %v959, %v1071
          %s1074 = sld [smem:[#allocation4 + $0x5]]
          %s1075 = sld [smem:[#allocation4 + $0x36]]
          %v1076 = vstv %s1074
          %v1077 = vmul.f32 %v1076, %v374
          %v1078 = vmul.f32 %v1076, %v375
          %v1079 = vstv %s1075
          %v1080 = vmul.f32 %v1079, %v376
          %v1081 = vmul.f32 %v1079, %v377
          %v1082 = vadd.f32 %v1077, %v1080
          %v1083 = vadd.f32 %v1078, %v1081
          %s1084 = sld [smem:[#allocation4 + $0xc]]
          %s1085 = sld [smem:[#allocation4 + $0x3d]]
          %v1086 = vstv %s1084
          %v1087 = vmul.f32 %v1086, %v404
          %v1088 = vmul.f32 %v1086, %v405
          %v1089 = vstv %s1085
          %v1090 = vmul.f32 %v1089, %v406
          %v1091 = vmul.f32 %v1089, %v407
          %v1092 = vadd.f32 %v1087, %v1090
          %v1093 = vadd.f32 %v1088, %v1091
          %v1094 = vadd.f32 %v1082, %v1092
          %v1095 = vadd.f32 %v1083, %v1093
          %s1096 = sld [smem:[#allocation4 + $0x13]]
          %s1097 = sld [smem:[#allocation4 + $0x44]]
          %v1098 = vstv %s1096
          %v1099 = vmul.f32 %v1098, %v434
          %v1100 = vmul.f32 %v1098, %v435
          %v1101 = vstv %s1097
          %v1102 = vmul.f32 %v1101, %v436
          %v1103 = vmul.f32 %v1101, %v437
          %v1104 = vadd.f32 %v1099, %v1102
          %v1105 = vadd.f32 %v1100, %v1103
          %v1106 = vadd.f32 %v1094, %v1104
          %v1107 = vadd.f32 %v1095, %v1105
          %s1108 = sld [smem:[#allocation4 + $0x1a]]
          %s1109 = sld [smem:[#allocation4 + $0x4b]]
          %v1110 = vstv %s1108
          %v1111 = vmul.f32 %v1110, %v323
          %v1112 = vstv %s1109
          %v1113 = vmul.f32 %v1112, %v324
          %v1114 = vadd.f32 %v1111, %v1113
          %v1116 = vlaneseq
          %v1117 = vshrl.u32 %v1116, 7
          %v1118 = vsub.s32 0, %v1117
          %v1119 = vrot.slane %v1114, %v1118
          %v1120 = vlaneseq
          %v1121 = vshrl.u32 %v1120, 7
          %v1122 = vsub.s32 1, %v1121
          %v1123 = vrot.slane %v1114, %v1122
          %v1126 = vadd.f32 %v1106, %v1119
          %v1127 = vadd.f32 %v1107, %v1123
          %s1128 = sld [smem:[#allocation4 + $0x21]]
          %s1129 = sld [smem:[#allocation4 + $0x52]]
          %v1130 = vstv %s1128
          %v1131 = vmul.f32 %v1130, %v464
          %v1132 = vmul.f32 %v1130, %v465
          %v1133 = vstv %s1129
          %v1134 = vmul.f32 %v1133, %v466
          %v1135 = vmul.f32 %v1133, %v467
          %v1136 = vadd.f32 %v1131, %v1134
          %v1137 = vadd.f32 %v1132, %v1135
          %v1138 = vadd.f32 %v1126, %v1136
          %v1139 = vadd.f32 %v1127, %v1137
          %s1140 = sld [smem:[#allocation4 + $0x28]]
          %s1141 = sld [smem:[#allocation4 + $0x59]]
          %v1142 = vstv %s1140
          %v1143 = vmul.f32 %v1142, %v494
          %v1144 = vmul.f32 %v1142, %v495
          %v1145 = vstv %s1141
          %v1146 = vmul.f32 %v1145, %v496
          %v1147 = vmul.f32 %v1145, %v497
          %v1148 = vadd.f32 %v1143, %v1146
          %v1149 = vadd.f32 %v1144, %v1147
          %v1150 = vadd.f32 %v1138, %v1148
          %v1151 = vadd.f32 %v1139, %v1149
          %s1152 = sld [smem:[#allocation4 + $0x2f]]
          %s1153 = sld [smem:[#allocation4 + $0x60]]
          %v1154 = vstv %s1152
          %v1155 = vmul.f32 %v1154, %v524
          %v1156 = vmul.f32 %v1154, %v525
          %v1157 = vstv %s1153
          %v1158 = vmul.f32 %v1157, %v526
          %v1159 = vmul.f32 %v1157, %v527
          %v1160 = vadd.f32 %v1155, %v1158
          %v1161 = vadd.f32 %v1156, %v1159
          %v1162 = vadd.f32 %v1150, %v1160
          %v1163 = vadd.f32 %v1151, %v1161
          %1164 = vrot.lane.b32.xlu0 %v1162, 126
          %v1165 = vpop.permute.xlu0 %1164
          %1166 = vrot.lane.b32.xlu0 %v1163, 126
          %v1167 = vpop.permute.xlu0 %1166
          %vm1168 = vcmp.lt.s32.totalorder %v341, 126
          %v1169 = vsel %vm1168, %v1165, %v1167
          %v1170 = vsel %vm1168, %v1167, %v1165
          %s1171 = scalar_lea.vmem [#allocation8], 20
          %v1172 = vld [vmem:[%s1171] ss:$8 sm:$0x3]
          %v1174 = vlaneseq
          %v1175 = vshrl.u32 %v1174, 7
          %v1176 = vsub.s32 0, %v1175
          %v1177 = vrot.slane %v1172, %v1176
          %v1178 = vlaneseq
          %v1179 = vshrl.u32 %v1178, 7
          %v1180 = vsub.s32 1, %v1179
          %v1181 = vrot.slane %v1172, %v1180
          %v1184 = vmul.f32 %v1169, %v1177
          %v1185 = vmul.f32 %v1170, %v1181
          %v1186 = vadd.f32 %v1072, %v1184
          %v1187 = vadd.f32 %v1073, %v1185
          %s1188 = sld [smem:[#allocation4 + $0x6]]
          %s1189 = sld [smem:[#allocation4 + $0x37]]
          %v1190 = vstv %s1188
          %v1191 = vmul.f32 %v1190, %v374
          %v1192 = vmul.f32 %v1190, %v375
          %v1193 = vstv %s1189
          %v1194 = vmul.f32 %v1193, %v376
          %v1195 = vmul.f32 %v1193, %v377
          %v1196 = vadd.f32 %v1191, %v1194
          %v1197 = vadd.f32 %v1192, %v1195
          %s1198 = sld [smem:[#allocation4 + $0xd]]
          %s1199 = sld [smem:[#allocation4 + $0x3e]]
          %v1200 = vstv %s1198
          %v1201 = vmul.f32 %v1200, %v404
          %v1202 = vmul.f32 %v1200, %v405
          %v1203 = vstv %s1199
          %v1204 = vmul.f32 %v1203, %v406
          %v1205 = vmul.f32 %v1203, %v407
          %v1206 = vadd.f32 %v1201, %v1204
          %v1207 = vadd.f32 %v1202, %v1205
          %v1208 = vadd.f32 %v1196, %v1206
          %v1209 = vadd.f32 %v1197, %v1207
          %s1210 = sld [smem:[#allocation4 + $0x14]]
          %s1211 = sld [smem:[#allocation4 + $0x45]]
          %v1212 = vstv %s1210
          %v1213 = vmul.f32 %v1212, %v434
          %v1214 = vmul.f32 %v1212, %v435
          %v1215 = vstv %s1211
          %v1216 = vmul.f32 %v1215, %v436
          %v1217 = vmul.f32 %v1215, %v437
          %v1218 = vadd.f32 %v1213, %v1216
          %v1219 = vadd.f32 %v1214, %v1217
          %v1220 = vadd.f32 %v1208, %v1218
          %v1221 = vadd.f32 %v1209, %v1219
          %s1222 = sld [smem:[#allocation4 + $0x1b]]
          %s1223 = sld [smem:[#allocation4 + $0x4c]]
          %v1224 = vstv %s1222
          %v1225 = vmul.f32 %v1224, %v323
          %v1226 = vstv %s1223
          %v1227 = vmul.f32 %v1226, %v324
          %v1228 = vadd.f32 %v1225, %v1227
          %v1230 = vlaneseq
          %v1231 = vshrl.u32 %v1230, 7
          %v1232 = vsub.s32 0, %v1231
          %v1233 = vrot.slane %v1228, %v1232
          %v1234 = vlaneseq
          %v1235 = vshrl.u32 %v1234, 7
          %v1236 = vsub.s32 1, %v1235
          %v1237 = vrot.slane %v1228, %v1236
          %v1240 = vadd.f32 %v1220, %v1233
          %v1241 = vadd.f32 %v1221, %v1237
          %s1242 = sld [smem:[#allocation4 + $0x22]]
          %s1243 = sld [smem:[#allocation4 + $0x53]]
          %v1244 = vstv %s1242
          %v1245 = vmul.f32 %v1244, %v464
          %v1246 = vmul.f32 %v1244, %v465
          %v1247 = vstv %s1243
          %v1248 = vmul.f32 %v1247, %v466
          %v1249 = vmul.f32 %v1247, %v467
          %v1250 = vadd.f32 %v1245, %v1248
          %v1251 = vadd.f32 %v1246, %v1249
          %v1252 = vadd.f32 %v1240, %v1250
          %v1253 = vadd.f32 %v1241, %v1251
          %s1254 = sld [smem:[#allocation4 + $0x29]]
          %s1255 = sld [smem:[#allocation4 + $0x5a]]
          %v1256 = vstv %s1254
          %v1257 = vmul.f32 %v1256, %v494
          %v1258 = vmul.f32 %v1256, %v495
          %v1259 = vstv %s1255
          %v1260 = vmul.f32 %v1259, %v496
          %v1261 = vmul.f32 %v1259, %v497
          %v1262 = vadd.f32 %v1257, %v1260
          %v1263 = vadd.f32 %v1258, %v1261
          %v1264 = vadd.f32 %v1252, %v1262
          %v1265 = vadd.f32 %v1253, %v1263
          %s1266 = sld [smem:[#allocation4 + $0x30]]
          %s1267 = sld [smem:[#allocation4 + $0x61]]
          %v1268 = vstv %s1266
          %v1269 = vmul.f32 %v1268, %v524
          %v1270 = vmul.f32 %v1268, %v525
          %v1271 = vstv %s1267
          %v1272 = vmul.f32 %v1271, %v526
          %v1273 = vmul.f32 %v1271, %v527
          %v1274 = vadd.f32 %v1269, %v1272
          %v1275 = vadd.f32 %v1270, %v1273
          %v1276 = vadd.f32 %v1264, %v1274
          %v1277 = vadd.f32 %v1265, %v1275
          %1278 = vrot.lane.b32.xlu0 %v1276, 125
          %v1279 = vpop.permute.xlu0 %1278
          %1280 = vrot.lane.b32.xlu0 %v1277, 125
          %v1281 = vpop.permute.xlu0 %1280
          %vm1282 = vcmp.lt.s32.totalorder %v341, 125
          %v1283 = vsel %vm1282, %v1279, %v1281
          %v1284 = vsel %vm1282, %v1281, %v1279
          %s1285 = scalar_lea.vmem [#allocation8], 21
          %v1286 = vld [vmem:[%s1285] ss:$8 sm:$0x3]
          %v1288 = vlaneseq
          %v1289 = vshrl.u32 %v1288, 7
          %v1290 = vsub.s32 0, %v1289
          %v1291 = vrot.slane %v1286, %v1290
          %v1292 = vlaneseq
          %v1293 = vshrl.u32 %v1292, 7
          %v1294 = vsub.s32 1, %v1293
          %v1295 = vrot.slane %v1286, %v1294
          %v1298 = vmul.f32 %v1283, %v1291
          %v1299 = vmul.f32 %v1284, %v1295
          %v1300 = vadd.f32 %v1186, %v1298
          %v1301 = vadd.f32 %v1187, %v1299
          %v1302 = vxor.u32 %v1300, 2147483648
          %v1303 = vxor.u32 %v1301, 2147483648
          %v1304 = vmul.f32 %v1302, 1.442695
          %v1305 = vpow.pop %v1304
          %v1306 = vmul.f32 %v1303, 1.442695
          %v1307 = vpow.pop %v1306
          %v1308 = vadd.f32 %v1305, 1.0
          %v1309 = vadd.f32 %v1307, 1.0
          %v1310 = vrcp.pop %v1308
          %v1311 = vmul.f32 1.0, %v1310
          %v1312 = vrcp.pop %v1309
          %v1313 = vmul.f32 1.0, %v1312
          %v1316 = vcombine.low %v1311, %v1313
          %v1318 = vunpack.c.l.s4 1966171168
          %v1319 = vunpack.c.0.s8 %v1318
          %v1320 = vlaneseq
          %v1321 = vshrl.u32 %v1320, 7
          %v1322 = vsub.s32 %v1319, %v1321
          %v1323 = vrot.slane %v1316, %v1322
          %v1325 = vunpack.c.l.s4 1966171168
          %v1326 = vunpack.c.0.s8 %v1325
          %v1327 = vlaneseq
          %v1328 = vshrl.u32 %v1327, 7
          %v1329 = vsub.s32 %v1326, %v1328
          %v1330 = vrot.slane %v1323, %v1329
          %1332 = vst.msk [vmem:[%s229] sm:$0x3] %vm282, %v1330
        $region52: #{tpu_custom_call.1} parent=31 // pred_fallthru
          _
        %s1333 = sand.u32 %s112, 1
        %s1334 = scalar_lea.sflag [#allocation6], %s1333
        %s1335 = sand.u32 %s112, 1
        %s1336 = smul.addr %s1335, 2
        %s1337 = scalar_lea.vmem [#allocation11], %s1336
        // Predicated region
        $region53: #{tpu_custom_call.1} parent=31 // pred_check
          %p1338 = pneg %p122
        $region54: #{tpu_custom_call.1} parent=31 // pred_check_branch
          %1340 = sbr.rel (%p1338) target = $region56
        $region55: #{tpu_custom_call.1} parent=31 // pred_region
          %s1342 = ssub.s32 32, 32
          %1343 = vsyncadd %s1334, %s1342
          %s1344 = smul.addr %s26, 2
          %s1345 = smul.addr %s1344, 16
          %s1346 = scalar_lea.hbm %s3, %s1345
          %s1348 = sshll.u32 %s1337, 4
          %s1349 = int_to_ptr.vmem [resolvable:$true] %s1348
          %1351 = dma.vmem_to_hbm [thread:$0]  %s1349, 32, %s1346, %s1334
        $region56: #{tpu_custom_call.1} parent=31 // pred_fallthru
          _
      $region32: #{tpu_custom_call.1} parent=5 // pred_fallthru
        _
      %p1352 = scmp.le.s32.totalorder 2, %s17
      // Predicated region
      $region57: #{tpu_custom_call.1} parent=5 // pred_check
        %p1353 = pneg %p1352
      $region58: #{tpu_custom_call.1} parent=5 // pred_check_branch
        %1355 = sbr.rel (%p1353) target = $region60
      $region59: #{tpu_custom_call.1} parent=5 // pred_region
        %s1356 = ssub.s32 %s17, 2
        // Predicated region
        $region61: #{tpu_custom_call.1} parent=59 // pred_check
          %p1357 = pneg %p128
        $region62: #{tpu_custom_call.1} parent=59 // pred_check_branch
          %1359 = sbr.rel (%p1357) target = $region64
        $region63: #{tpu_custom_call.1} parent=59 // pred_region
          %s1360 = sand.u32 %s113, 1
          %s1361 = scalar_lea.sflag [#allocation6], %s1360
          %s1362 = sand.u32 %s113, 1
          %s1363 = smul.addr %s1362, 2
          %s1364 = scalar_lea.vmem [#allocation11], %s1363
          %1365 = dma.done %s1361, 32
        $region64: #{tpu_custom_call.1} parent=59 // pred_fallthru
          _
      $region60: #{tpu_custom_call.1} parent=5 // pred_fallthru
        _
    $region6: #{tpu_custom_call.1} parent=1 // loop_footer
      %s21 = sadd.s32 1, %s17
    $region7: #{tpu_custom_call.1} parent=1 // loop_footer_branch
      %16 = sbr.rel target = $region3
    $region8: #{tpu_custom_call.1} parent=1 // loop_exit
      _
    %1366 = vsyncpa [#allocation5], 1
    %s1367 = scalar_lea.sflag [#allocation5], 1
    %1368 = vsyncpa %s1367, 1
    %1369 = vsyncpa [#allocation10], 1
    %s1370 = scalar_lea.sflag [#allocation10], 1
    %1371 = vsyncpa %s1370, 1
    %1372 = vsyncpa [#allocation6], 1
    %s1373 = scalar_lea.sflag [#allocation6], 1
    %1374 = vsyncpa %s1373, 1
    %1375 = vsyncpa [#allocation7], 1
    %s1376 = scalar_lea.sflag [#allocation7], 1
    %1377 = vsyncpa %s1376, 1

</llo_original>
